<compile_context>
chip_gen: v7x
topology: tpu7x:2x2x1
jax: 0.10.0
libtpu: 0.0.40
codegen_flags: <defaults>
</compile_context>

<pallas_src>
import math
import functools

import jax
import jax.numpy as jnp
import numpy as np
from jax import lax
from jax.experimental import pallas as pl
from jax.experimental.pallas import tpu as pltpu


def _cdiv(a: int, b: int) -> int:
    return -(-a // b)


def _round_up(x: int, mult: int) -> int:
    return _cdiv(x, mult) * mult


@functools.lru_cache(maxsize=None)
def _tpu_kind() -> str:
    """Best-effort device-kind string ('' if not a TPU / query fails)."""
    try:
        d = jax.devices()[0]
        if d.platform != "tpu":
            return ""
        return str(getattr(d, "device_kind", "")).lower()
    except Exception:  # pragma: no cover
        return ""


def _num_tensorcores_per_chip() -> int:
    # v7x has 2 TensorCores per chip; v5e/v6e have 1.
    return 2 if "v7" in _tpu_kind() else 1


def _is_v5e() -> bool:
    k = _tpu_kind()
    return ("v5e" in k) or ("v5 lite" in k) or ("v5litepod" in k)


def _matern12_kernel(params_ref, a_ref, b_ref, o_ref, *, precision):
    """One (tn, tm) output tile of the Matern-1/2 kernel matrix.

    params_ref : SMEM (2,)      -> [clamp = 1e-30 / l**2, sigf**2]
    a_ref      : VMEM (tn, d+2) -> [-2/l^2 * x1c | ||x1c||^2/l^2 | 1]
    b_ref      : VMEM (d+2, tm) -> [x2c^T ; 1 ; ||x2c||^2/l^2]
    o_ref      : VMEM (tn, tm)

    a @ b == ||x1_i - x2_j||^2 / l^2 == r^2  (all distance work on the MXU).
    """
    clamp = params_ref[0]
    sig_sqrd = params_ref[1]

    r2 = jnp.dot(
        a_ref[...], b_ref[...],
        preferred_element_type=jnp.float32,
        precision=precision,
    )                                           # (tn, tm) == sqrd / l^2
    r2 = jnp.maximum(r2, clamp)
    # sqrt(r2) as r2 * rsqrt(r2): exactly one EUP rsqrt plus a VPU multiply
    # that hides under the EUP exp (v7x is EUP-bound for this kernel).
    r = r2 * lax.rsqrt(r2)
    o_ref[...] = (jnp.exp(-r) * sig_sqrd).astype(o_ref.dtype)


@functools.partial(jax.jit, static_argnames=("tn", "tm", "out_dtype"))
def matern12_forward(x1, x2, rawlen, rawsigf, *, tn=512, tm=2048,
                     out_dtype=jnp.float32):
    """Pallas implementation of Matern12.forward(x1, x2) (return_grad=False)."""
    if x1.ndim == 1:
        x1 = x1[:, None]
    if x2.ndim == 1:
        x2 = x2[:, None]

    # Natural parameters (tiny scalar glue). 1/l^2 and the clamp are folded
    # so the kernel does no divides.
    l = jnp.reshape(jax.nn.softplus(rawlen.astype(jnp.float32)), ())
    sigf = jnp.reshape(jax.nn.softplus(rawsigf.astype(jnp.float32)), ())
    inv_l2 = 1.0 / (l * l)
    params = jnp.stack([1e-30 * inv_l2, sigf * sigf]).astype(jnp.float32)  # (2,)

    # Identity input warping; mean-center (O((n+m)d) glue).
    x1f = x1.astype(jnp.float32)
    x2f = x2.astype(jnp.float32)
    mean = x1f.mean(0)
    x1c = x1f - mean                                      # (n, d)
    x2c = x2f - mean                                      # (m, d)
    n, d = x1c.shape
    m = x2c.shape[0]

    # Augmented operands: A @ B == ||x1_i - x2_j||^2 / l^2. Norms are computed
    # once here instead of per grid step inside the kernel.
    n1 = jnp.sum(x1c * x1c, axis=1, keepdims=True)        # (n, 1)
    n2 = jnp.sum(x2c * x2c, axis=1, keepdims=True)        # (m, 1)
    a = jnp.concatenate(
        [(-2.0 * inv_l2) * x1c, inv_l2 * n1, jnp.ones((n, 1), jnp.float32)],
        axis=1)                                           # (n, d+2)
    b = jnp.concatenate(
        [x2c, jnp.ones((m, 1), jnp.float32), inv_l2 * n2],
        axis=1).T                                         # (d+2, m)
    dk = d + 2

    # ---- Tile selection -----------------------------------------------------
    # Balanced tiles: cap waste on the ragged edge at < one tile row/col while
    # keeping sublane (8) / lane (128) alignment and lane-dense output stores.
    tn = max(8, (tn // 8) * 8)
    tm = max(128, (tm // 128) * 128)
    tn_eff = min(tn, _round_up(_cdiv(n, _cdiv(n, tn)), 8))
    tm_eff = min(tm, _round_up(_cdiv(m, _cdiv(m, tm)), 128))

    # v7x has 2 TensorCores: guarantee >=2 programs along a parallel axis so
    # both cores get work.  On single-TC v5e/v6e this split is pure per-step
    # overhead, so it is gated off there.
    if _num_tensorcores_per_chip() >= 2:
        if _cdiv(n, tn_eff) * _cdiv(m, tm_eff) < 2:
            if n >= 16:
                tn_eff = _round_up(_cdiv(n, 2), 8)
            elif m >= 256:
                tm_eff = _round_up(_cdiv(m, 2), 128)

    # ---- VMEM budgeting (safe on v7x's 64 MiB part) -------------------------
    out_itemsize = jnp.dtype(out_dtype).itemsize

    def _tile_bytes(tn_, tm_):
        return 4 * tn_ * dk + 4 * dk * tm_ + out_itemsize * tn_ * tm_

    budget = 24 << 20   # double-buffered working-set target
    while 2 * _tile_bytes(tn_eff, tm_eff) > budget and tm_eff > 128:
        tm_eff = max(128, _round_up(tm_eff // 2, 128))
    while 2 * _tile_bytes(tn_eff, tm_eff) > budget and tn_eff > 8:
        tn_eff = max(8, _round_up(tn_eff // 2, 8))

    vmem_limit = int(min(max(3 * _tile_bytes(tn_eff, tm_eff) + (4 << 20),
                             12 << 20), 40 << 20))

    grid = (_cdiv(n, tn_eff), _cdiv(m, tm_eff))

    # v5e's MXU is ~5x weaker: at large d drop HIGHEST (bf16x pass blow-up) to
    # HIGH; elsewhere keep HIGHEST to limit distance-cancellation error.
    precision = lax.Precision.HIGHEST
    if _is_v5e() and d >= 256:
        precision = lax.Precision.HIGH

    kernel = functools.partial(_matern12_kernel, precision=precision)

    # No padding of the output: Pallas masks the ragged edge blocks on store,
    # so there is no pad + re-slice round trip of the full (n, m) result.
    # (Out-of-bounds *input* rows/cols only feed out-of-bounds output elements,
    # which are discarded by the masked store.)
    # TODO(synk): for skinny kernels (min(n, m) < 128) a transposed, lane-dense
    # layout for the consumer would avoid masked vst; not needed here.
    out = pl.pallas_call(
        kernel,
        out_shape=jax.ShapeDtypeStruct((n, m), out_dtype),
        grid_spec=pltpu.PrefetchScalarGridSpec(
            num_scalar_prefetch=0,
            grid=grid,
            in_specs=[
                pl.BlockSpec(memory_space=pltpu.MemorySpace.SMEM),      # params
                pl.BlockSpec((tn_eff, dk), lambda i, j: (i, 0)),        # A tile
                pl.BlockSpec((dk, tm_eff), lambda i, j: (0, j)),        # B tile
            ],
            out_specs=pl.BlockSpec((tn_eff, tm_eff), lambda i, j: (i, j)),
        ),
        compiler_params=pltpu.CompilerParams(
            dimension_semantics=("parallel", "parallel"),
            vmem_limit_bytes=vmem_limit,
        ),
    )(params, a, b)

    return out


def matern12_reference(x1, x2, rawlen, rawsigf):
    """Pure-JAX reference mirroring the PyTorch forward."""
    l = jax.nn.softplus(rawlen)
    sigf = jax.nn.softplus(rawsigf)
    mean = x1.mean(0)
    diff = (x1 - mean)[:, None, :] - (x2 - mean)[None, :, :]
    sqrd = jnp.sum(diff ** 2, axis=-1)
    r = jnp.sqrt(jnp.maximum(sqrd, 1e-30)) / l
    return jnp.exp(-r) * (sigf ** 2)


if __name__ == "__main__":
    # Deterministic parameter init, matching Matern12.reset_parameters(len_init=1.0):
    #   rawlen  = inverse_softplus(1.0) = log(e - 1)
    #   rawsigf = 0.5413  (so softplus(rawsigf) ~= 1.0)
    rawlen = jnp.asarray(math.log(math.e - 1.0), jnp.float32)
    rawsigf = jnp.asarray(0.5413, jnp.float32)

    # Small shapes: n points x d features vs m points x d features.
    n, m, d = 256, 128, 8
    key = jax.random.PRNGKey(0)
    k1, k2 = jax.random.split(key)
    x1 = jax.random.normal(k1, (n, d), dtype=jnp.float32)
    x2 = jax.random.normal(k2, (m, d), dtype=jnp.float32)

    k_out = matern12_forward(x1, x2, rawlen, rawsigf)
    k_out = jax.block_until_ready(k_out)

    k_ref = matern12_reference(x1, x2, rawlen, rawsigf)
    np.testing.assert_allclose(np.asarray(k_out), np.asarray(k_ref),
                               rtol=5e-5, atol=1e-5)

    # TODO(synk): return_grad=True branch (dkdt) not implemented; only the
    # default forward (k) path is required here.
    print("KERNEL_OK")
</pallas_src>

<mosaic_0001>
module attributes {stable_mosaic.version = 11 : i64} {
  func.func @_matern12_kernel(%arg0: i32, %arg1: i32, %arg2: memref<2xf32, #tpu.memory_space<smem>>, %arg3: memref<256x10xf32, #tpu.memory_space<vmem>>, %arg4: memref<10x128xf32, #tpu.memory_space<vmem>>, %arg5: memref<256x128xf32, #tpu.memory_space<vmem>>) attributes {dimension_semantics = [#tpu.dimension_semantics<parallel>, #tpu.dimension_semantics<parallel>], iteration_bounds = array<i64: 1, 1>, scalar_prefetch = 0 : i64, scratch_operands = 0 : i64, tpu.core_type = #tpu.core_type<tc>, window_params = [{transform_indices = @transform_0, window_bounds = array<i64: 2>}, {transform_indices = @transform_1, window_bounds = array<i64: 256, 10>}, {transform_indices = @transform_2, window_bounds = array<i64: 10, 128>}, {transform_indices = @transform_3, window_bounds = array<i64: 256, 128>}]} {
    %c0 = arith.constant 0 : index
    %0 = memref.load %arg2[%c0] : memref<2xf32, #tpu.memory_space<smem>>
    %c1 = arith.constant 1 : index
    %1 = memref.load %arg2[%c1] : memref<2xf32, #tpu.memory_space<smem>>
    %c0_0 = arith.constant 0 : index
    %c0_1 = arith.constant 0 : index
    %2 = vector.load %arg3[%c0_0, %c0_1] : memref<256x10xf32, #tpu.memory_space<vmem>>, vector<256x10xf32>
    %c0_2 = arith.constant 0 : index
    %c0_3 = arith.constant 0 : index
    %3 = vector.load %arg4[%c0_2, %c0_3] : memref<10x128xf32, #tpu.memory_space<vmem>>, vector<10x128xf32>
    %cst = arith.constant dense<0.000000e+00> : vector<256x128xf32>
    %4 = tpu.matmul %2, %3, %cst {dimension_numbers = #tpu.dot_dimension_numbers<[1], [0], [0], [1], [0, 0, 1, 1], [], []>, precision = #tpu.contract_precision<fp32>} : vector<256x10xf32>, vector<10x128xf32>, vector<256x128xf32> -> vector<256x128xf32>
    %5 = vector.broadcast %0 : f32 to vector<256x128xf32>
    %6 = arith.maximumf %4, %5 : vector<256x128xf32>
    %7 = math.rsqrt %6 : vector<256x128xf32>
    %8 = arith.mulf %6, %7 : vector<256x128xf32>
    %cst_4 = arith.constant 0.000000e+00 : f32
    %9 = vector.broadcast %cst_4 : f32 to vector<256x128xf32>
    %10 = arith.subf %9, %8 : vector<256x128xf32>
    %11 = math.exp %10 : vector<256x128xf32>
    %12 = vector.broadcast %1 : f32 to vector<256x128xf32>
    %13 = arith.mulf %11, %12 : vector<256x128xf32>
    %c0_5 = arith.constant 0 : index
    %c0_6 = arith.constant 0 : index
    %14 = vector.load %arg5[%c0_5, %c0_6] : memref<256x128xf32, #tpu.memory_space<vmem>>, vector<256x128xf32>
    tpu.vector_store %arg5[%c0_5, %c0_6], %13 {strides = array<i32>} : memref<256x128xf32, #tpu.memory_space<vmem>>, vector<256x128xf32>,
    return
  }
  func.func @transform_0(%arg0: i32, %arg1: i32) -> i32 {
    %c0_i32 = arith.constant 0 : i32
    %c0_i32_0 = arith.constant 0 : i32
    return %c0_i32 : i32
  }
  func.func @transform_1(%arg0: i32, %arg1: i32) -> (i32, i32) {
    %c0_i32 = arith.constant 0 : i32
    %c0_i32_0 = arith.constant 0 : i32
    return %arg0, %c0_i32 : i32, i32
  }
  func.func @transform_2(%arg0: i32, %arg1: i32) -> (i32, i32) {
    %c0_i32 = arith.constant 0 : i32
    %c0_i32_0 = arith.constant 0 : i32
    return %c0_i32, %arg1 : i32, i32
  }
  func.func @transform_3(%arg0: i32, %arg1: i32) -> (i32, i32) {
    %c0_i32 = arith.constant 0 : i32
    return %arg0, %arg1 : i32, i32
  }
}

</mosaic_0001>

<llo_original>
// kernel: matern12_forward.1
$region0: #{matern12_forward.1}
  #allocation0 [shape = 'u32[]', space=smem, size = 0x4, offset = 0x4, fixed_abs, tag = 'smem constant byte address 0x4 - core index']
  #allocation1 [shape = 'u32[144,128]{1,0:T(1,128)}', space=vmem, size = 0x12000, scoped, tag = 'internal scratch']
  %s0 = inlined_call_operand.vmem [shape: f32[2], index: 0, kind: input, shape index: {}]
  %s1 = inlined_call_operand.vmem [shape: f32[256,10], index: 1, kind: input, shape index: {}]
  %s2 = inlined_call_operand.vmem [shape: f32[10,128], index: 2, kind: input, shape index: {}]
  %s3 = inlined_call_operand.hbm [shape: f32[256,128], index: 3, kind: output, shape index: {}]
  %s4 = sld [smem:[#allocation0]]
  $region26: #{matern12_forward.1} parent=0
    _
  %s6 = ssub.s32 1, %s4
  %s7 = scalar_select 0, %s6, %s4
  $region1: #{matern12_forward.1} parent=0
    #allocation2 [shape = 'u8[512]{0}', space=smem, size = 0x200, scoped, tag = 'input window, operand 0, single buffered']
    #allocation3 [shape = 's32[1]{0}', space=sflag, size = 0x4, scoped, tag = 'scoped memory for matern12_forward.1']
    #allocation4 [shape = 's32[1]{0}', space=sflag, size = 0x4, scoped, tag = 'scoped memory for matern12_forward.1']
    #allocation5 [shape = 'u8[131072]{0}', space=vmem, size = 0x20000, scoped, tag = 'output window, operand 0, single buffered']
    %8 = vsyncpa [#allocation4], 0
    %9 = vsyncpa [#allocation3], 0
    // Predicated region
    $region2: #{matern12_forward.1} parent=1 // pred_check
      _
    $region3: #{matern12_forward.1} parent=1 // pred_check_branch
      %11 = sbr.rel (0) target = $region5
    $region4: #{matern12_forward.1} parent=1 // pred_region
      %s13 = ssub.s32 16, 16
      %14 = vsyncadd [#allocation4], %s13
      %s16 = sshll.u32 %s0, 4
      %s17 = int_to_ptr.vmem [resolvable:$true] %s16
      %19 = dma.vmem_to_smem %s17, 16, [#allocation2], [#allocation4]
    $region5: #{matern12_forward.1} parent=1 // pred_fallthru
      _
    // Predicated region
    $region6: #{matern12_forward.1} parent=1 // pred_check
      _
    $region7: #{matern12_forward.1} parent=1 // pred_check_branch
      %21 = sbr.rel (0) target = $region9
    $region8: #{matern12_forward.1} parent=1 // pred_region
      _
    $region9: #{matern12_forward.1} parent=1 // pred_fallthru
      _
    // Predicated region
    $region10: #{matern12_forward.1} parent=1 // pred_check
      _
    $region11: #{matern12_forward.1} parent=1 // pred_check_branch
      %23 = sbr.rel (0) target = $region13
    $region12: #{matern12_forward.1} parent=1 // pred_region
      _
    $region13: #{matern12_forward.1} parent=1 // pred_fallthru
      _
    // Predicated region
    $region14: #{matern12_forward.1} parent=1 // pred_check
      _
    $region15: #{matern12_forward.1} parent=1 // pred_check_branch
      %25 = sbr.rel (0) target = $region17
    $region16: #{matern12_forward.1} parent=1 // pred_region
      %26 = dma.done [#allocation4], 16
    $region17: #{matern12_forward.1} parent=1 // pred_fallthru
      _
    %27 = sfence
    %s28 = sld [smem:[#allocation2]]
    %s29 = sld [smem:[#allocation2 + $0x1]]
    %v30 = vld [vmem:[%s1] sm:$0xff]
    %v31 = vld [vmem:[%s1 + $0x8] sm:$0xff]
    %v32 = vld [vmem:[%s1 + $0x10] sm:$0xff]
    %v33 = vld [vmem:[%s1 + $0x18] sm:$0xff]
    %v34 = vld [vmem:[%s1 + $0x20] sm:$0xff]
    %v35 = vld [vmem:[%s1 + $0x28] sm:$0xff]
    %v36 = vld [vmem:[%s1 + $0x30] sm:$0xff]
    %v37 = vld [vmem:[%s1 + $0x38] sm:$0xff]
    %v38 = vld [vmem:[%s1 + $0x40] sm:$0xff]
    %v39 = vld [vmem:[%s1 + $0x48] sm:$0xff]
    %v40 = vld [vmem:[%s1 + $0x50] sm:$0xff]
    %v41 = vld [vmem:[%s1 + $0x58] sm:$0xff]
    %v42 = vld [vmem:[%s1 + $0x60] sm:$0xff]
    %v43 = vld [vmem:[%s1 + $0x68] sm:$0xff]
    %v44 = vld [vmem:[%s1 + $0x70] sm:$0xff]
    %v45 = vld [vmem:[%s1 + $0x78] sm:$0xff]
    %v46 = vld [vmem:[%s1 + $0x80] sm:$0xff]
    %v47 = vld [vmem:[%s1 + $0x88] sm:$0xff]
    %v48 = vld [vmem:[%s1 + $0x90] sm:$0xff]
    %v49 = vld [vmem:[%s1 + $0x98] sm:$0xff]
    %v50 = vld [vmem:[%s1 + $0xa0] sm:$0xff]
    %v51 = vld [vmem:[%s1 + $0xa8] sm:$0xff]
    %v52 = vld [vmem:[%s1 + $0xb0] sm:$0xff]
    %v53 = vld [vmem:[%s1 + $0xb8] sm:$0xff]
    %v54 = vld [vmem:[%s1 + $0xc0] sm:$0xff]
    %v55 = vld [vmem:[%s1 + $0xc8] sm:$0xff]
    %v56 = vld [vmem:[%s1 + $0xd0] sm:$0xff]
    %v57 = vld [vmem:[%s1 + $0xd8] sm:$0xff]
    %v58 = vld [vmem:[%s1 + $0xe0] sm:$0xff]
    %v59 = vld [vmem:[%s1 + $0xe8] sm:$0xff]
    %v60 = vld [vmem:[%s1 + $0xf0] sm:$0xff]
    %v61 = vld [vmem:[%s1 + $0xf8] sm:$0xff]
    %v62 = vld [vmem:[%s2] sm:$0xff]
    %v63 = vld [vmem:[%s2 + $0x8] sm:$0x3]
    %vm64 = vcmask 80896
    %v66 = vsel %vm64, %v30, 0
    %v69 = vsel %vm64, %v31, 0
    %v72 = vsel %vm64, %v32, 0
    %v75 = vsel %vm64, %v33, 0
    %v78 = vsel %vm64, %v34, 0
    %v81 = vsel %vm64, %v35, 0
    %v84 = vsel %vm64, %v36, 0
    %v87 = vsel %vm64, %v37, 0
    %v90 = vsel %vm64, %v38, 0
    %v93 = vsel %vm64, %v39, 0
    %v96 = vsel %vm64, %v40, 0
    %v99 = vsel %vm64, %v41, 0
    %v102 = vsel %vm64, %v42, 0
    %v105 = vsel %vm64, %v43, 0
    %v108 = vsel %vm64, %v44, 0
    %v111 = vsel %vm64, %v45, 0
    %v114 = vsel %vm64, %v46, 0
    %v117 = vsel %vm64, %v47, 0
    %v120 = vsel %vm64, %v48, 0
    %v123 = vsel %vm64, %v49, 0
    %v126 = vsel %vm64, %v50, 0
    %v129 = vsel %vm64, %v51, 0
    %v132 = vsel %vm64, %v52, 0
    %v135 = vsel %vm64, %v53, 0
    %v138 = vsel %vm64, %v54, 0
    %v141 = vsel %vm64, %v55, 0
    %v144 = vsel %vm64, %v56, 0
    %v147 = vsel %vm64, %v57, 0
    %v150 = vsel %vm64, %v58, 0
    %v153 = vsel %vm64, %v59, 0
    %v156 = vsel %vm64, %v60, 0
    %v159 = vsel %vm64, %v61, 0
    %vm161 = vcmask 1041408
    %v163 = vsel %vm161, %v63, 0
    %165 = vmatprep.subr.mxu0 0.0
    %v166 = vand.u32 %v62, 4294901760
    %167 = vmatpush1.msra.mxu0 %v166
    %168 = vmatprep.subr.mxu0 0.0
    %v169 = vand.u32 %v163, 4294901760
    %170 = vmatpush1.msra.mxu0 %v169
    %171 = vmatprep.subr.mxu0 0.0
    %172 = vmatpush1.msra.mxu0 0.0
    %173 = vmatprep.subr.mxu0 0.0
    %174 = vmatpush1.msra.mxu0 0.0
    %175 = vmatprep.subr.mxu0 0.0
    %176 = vmatpush1.msra.mxu0 0.0
    %177 = vmatprep.subr.mxu0 0.0
    %178 = vmatpush1.msra.mxu0 0.0
    %179 = vmatprep.subr.mxu0 0.0
    %180 = vmatpush1.msra.mxu0 0.0
    %181 = vmatprep.subr.mxu0 0.0
    %182 = vmatpush1.msra.mxu0 0.0
    %183 = vmatprep.subr.mxu0 0.0
    %184 = vmatpush1.msra.mxu0 0.0
    %185 = vmatprep.subr.mxu0 0.0
    %186 = vmatpush1.msra.mxu0 0.0
    %187 = vmatprep.subr.mxu0 0.0
    %188 = vmatpush1.msra.mxu0 0.0
    %189 = vmatprep.subr.mxu0 0.0
    %190 = vmatpush1.msra.mxu0 0.0
    %191 = vmatprep.subr.mxu0 0.0
    %192 = vmatpush1.msra.mxu0 0.0
    %193 = vmatprep.subr.mxu0 0.0
    %194 = vmatpush1.msra.mxu0 0.0
    %195 = vmatprep.subr.mxu0 0.0
    %196 = vmatpush1.msra.mxu0 0.0
    %197 = vmatprep.subr.mxu0 0.0
    %198 = vmatpush1.msra.mxu0 0.0
    %199 = vmatprep.subr.mxu0 0.0
    %200 = vmatpush1.msra.mxu0 0.0
    %201 = vmatprep.subr.mxu0 0.0
    %202 = vmatpush1.msra.mxu0 0.0
    %203 = vmatprep.subr.mxu0 0.0
    %204 = vmatpush1.msra.mxu0 0.0
    %205 = vmatprep.subr.mxu0 0.0
    %206 = vmatpush1.msra.mxu0 0.0
    %207 = vmatprep.subr.mxu0 0.0
    %208 = vmatpush1.msra.mxu0 0.0
    %209 = vmatprep.subr.mxu0 0.0
    %210 = vmatpush1.msra.mxu0 0.0
    %211 = vmatprep.subr.mxu0 0.0
    %212 = vmatpush1.msra.mxu0 0.0
    %213 = vmatprep.subr.mxu0 0.0
    %214 = vmatpush1.msra.mxu0 0.0
    %215 = vmatprep.subr.mxu0 0.0
    %216 = vmatpush1.msra.mxu0 0.0
    %217 = vmatprep.subr.mxu0 0.0
    %218 = vmatpush1.msra.mxu0 0.0
    %219 = vmatprep.subr.mxu0 0.0
    %220 = vmatpush1.msra.mxu0 0.0
    %221 = vmatprep.subr.mxu0 0.0
    %222 = vmatpush1.msra.mxu0 0.0
    %223 = vmatprep.subr.mxu0 0.0
    %224 = vmatpush1.msra.mxu0 0.0
    %225 = vmatprep.subr.mxu0 0.0
    %226 = vmatpush1.msra.mxu0 0.0
    %227 = vmatprep.subr.mxu0 0.0
    %228 = vmatpush1.msra.mxu0 0.0
    %229 = vmatprep.subr.mxu0 0.0
    %230 = vmatpush1.msra.mxu0 0.0
    %231 = vmatprep.mubr.f32.mxu0 0.0
    %v232 = vand.u32 %v66, 4294901760
    %v233 = vsub.f32 %v66, %v232
    %v234 = vand.u32 %v233, 4294901760
    %v235 = vsub.f32 %v233, %v234
    %v236 = vand.u32 %v235, 4294901760
    %237 = vmatmul.mubr.f32.gmra.mrb[0].mxu0 %v236
    %v238 = vpop.f32.mrb[0].mxu0
    %v239 = vadd.f32 0.0, %v238
    %v240 = vpop.f32.mrb[0].mxu0
    %241 = vmatprep.mubr.f32.mxu0 0.0
    %v242 = vand.u32 %v69, 4294901760
    %v243 = vsub.f32 %v69, %v242
    %v244 = vand.u32 %v243, 4294901760
    %v245 = vsub.f32 %v243, %v244
    %v246 = vand.u32 %v245, 4294901760
    %247 = vmatmul.mubr.f32.gmra.mrb[0].mxu0 %v246
    %v248 = vpop.f32.mrb[0].mxu0
    %v249 = vadd.f32 0.0, %v248
    %v250 = vpop.f32.mrb[0].mxu0
    %251 = vmatprep.mubr.f32.mxu0 0.0
    %v252 = vand.u32 %v72, 4294901760
    %v253 = vsub.f32 %v72, %v252
    %v254 = vand.u32 %v253, 4294901760
    %v255 = vsub.f32 %v253, %v254
    %v256 = vand.u32 %v255, 4294901760
    %257 = vmatmul.mubr.f32.gmra.mrb[0].mxu0 %v256
    %v258 = vpop.f32.mrb[0].mxu0
    %v259 = vadd.f32 0.0, %v258
    %v260 = vpop.f32.mrb[0].mxu0
    %261 = vmatprep.mubr.f32.mxu0 0.0
    %v262 = vand.u32 %v75, 4294901760
    %v263 = vsub.f32 %v75, %v262
    %v264 = vand.u32 %v263, 4294901760
    %v265 = vsub.f32 %v263, %v264
    %v266 = vand.u32 %v265, 4294901760
    %267 = vmatmul.mubr.f32.gmra.mrb[0].mxu0 %v266
    %v268 = vpop.f32.mrb[0].mxu0
    %v269 = vadd.f32 0.0, %v268
    %v270 = vpop.f32.mrb[0].mxu0
    %271 = vmatprep.mubr.f32.mxu0 0.0
    %v272 = vand.u32 %v78, 4294901760
    %v273 = vsub.f32 %v78, %v272
    %v274 = vand.u32 %v273, 4294901760
    %v275 = vsub.f32 %v273, %v274
    %v276 = vand.u32 %v275, 4294901760
    %277 = vmatmul.mubr.f32.gmra.mrb[0].mxu0 %v276
    %v278 = vpop.f32.mrb[0].mxu0
    %v279 = vadd.f32 0.0, %v278
    %v280 = vpop.f32.mrb[0].mxu0
    %281 = vmatprep.mubr.f32.mxu0 0.0
    %v282 = vand.u32 %v81, 4294901760
    %v283 = vsub.f32 %v81, %v282
    %v284 = vand.u32 %v283, 4294901760
    %v285 = vsub.f32 %v283, %v284
    %v286 = vand.u32 %v285, 4294901760
    %287 = vmatmul.mubr.f32.gmra.mrb[0].mxu0 %v286
    %v288 = vpop.f32.mrb[0].mxu0
    %v289 = vadd.f32 0.0, %v288
    %v290 = vpop.f32.mrb[0].mxu0
    %291 = vmatprep.mubr.f32.mxu0 0.0
    %v292 = vand.u32 %v84, 4294901760
    %v293 = vsub.f32 %v84, %v292
    %v294 = vand.u32 %v293, 4294901760
    %v295 = vsub.f32 %v293, %v294
    %v296 = vand.u32 %v295, 4294901760
    %297 = vmatmul.mubr.f32.gmra.mrb[0].mxu0 %v296
    %v298 = vpop.f32.mrb[0].mxu0
    %v299 = vadd.f32 0.0, %v298
    %v300 = vpop.f32.mrb[0].mxu0
    %301 = vmatprep.mubr.f32.mxu0 0.0
    %v302 = vand.u32 %v87, 4294901760
    %v303 = vsub.f32 %v87, %v302
    %v304 = vand.u32 %v303, 4294901760
    %v305 = vsub.f32 %v303, %v304
    %v306 = vand.u32 %v305, 4294901760
    %307 = vmatmul.mubr.f32.gmra.mrb[0].mxu0 %v306
    %v308 = vpop.f32.mrb[0].mxu0
    %v309 = vadd.f32 0.0, %v308
    %v310 = vpop.f32.mrb[0].mxu0
    %311 = vmatprep.mubr.f32.mxu0 0.0
    %v312 = vand.u32 %v90, 4294901760
    %v313 = vsub.f32 %v90, %v312
    %v314 = vand.u32 %v313, 4294901760
    %v315 = vsub.f32 %v313, %v314
    %v316 = vand.u32 %v315, 4294901760
    %317 = vmatmul.mubr.f32.gmra.mrb[0].mxu0 %v316
    %v318 = vpop.f32.mrb[0].mxu0
    %v319 = vadd.f32 0.0, %v318
    %v320 = vpop.f32.mrb[0].mxu0
    %321 = vmatprep.mubr.f32.mxu0 0.0
    %v322 = vand.u32 %v93, 4294901760
    %v323 = vsub.f32 %v93, %v322
    %v324 = vand.u32 %v323, 4294901760
    %v325 = vsub.f32 %v323, %v324
    %v326 = vand.u32 %v325, 4294901760
    %327 = vmatmul.mubr.f32.gmra.mrb[0].mxu0 %v326
    %v328 = vpop.f32.mrb[0].mxu0
    %v329 = vadd.f32 0.0, %v328
    %v330 = vpop.f32.mrb[0].mxu0
    %331 = vmatprep.mubr.f32.mxu0 0.0
    %v332 = vand.u32 %v96, 4294901760
    %v333 = vsub.f32 %v96, %v332
    %v334 = vand.u32 %v333, 4294901760
    %v335 = vsub.f32 %v333, %v334
    %v336 = vand.u32 %v335, 4294901760
    %337 = vmatmul.mubr.f32.gmra.mrb[0].mxu0 %v336
    %v338 = vpop.f32.mrb[0].mxu0
    %v339 = vadd.f32 0.0, %v338
    %v340 = vpop.f32.mrb[0].mxu0
    %341 = vmatprep.mubr.f32.mxu0 0.0
    %v342 = vand.u32 %v99, 4294901760
    %v343 = vsub.f32 %v99, %v342
    %v344 = vand.u32 %v343, 4294901760
    %v345 = vsub.f32 %v343, %v344
    %v346 = vand.u32 %v345, 4294901760
    %347 = vmatmul.mubr.f32.gmra.mrb[0].mxu0 %v346
    %v348 = vpop.f32.mrb[0].mxu0
    %v349 = vadd.f32 0.0, %v348
    %v350 = vpop.f32.mrb[0].mxu0
    %351 = vmatprep.mubr.f32.mxu0 0.0
    %v352 = vand.u32 %v102, 4294901760
    %v353 = vsub.f32 %v102, %v352
    %v354 = vand.u32 %v353, 4294901760
    %v355 = vsub.f32 %v353, %v354
    %v356 = vand.u32 %v355, 4294901760
    %357 = vmatmul.mubr.f32.gmra.mrb[0].mxu0 %v356
    %v358 = vpop.f32.mrb[0].mxu0
    %v359 = vadd.f32 0.0, %v358
    %v360 = vpop.f32.mrb[0].mxu0
    %361 = vmatprep.mubr.f32.mxu0 0.0
    %v362 = vand.u32 %v105, 4294901760
    %v363 = vsub.f32 %v105, %v362
    %v364 = vand.u32 %v363, 4294901760
    %v365 = vsub.f32 %v363, %v364
    %v366 = vand.u32 %v365, 4294901760
    %367 = vmatmul.mubr.f32.gmra.mrb[0].mxu0 %v366
    %v368 = vpop.f32.mrb[0].mxu0
    %v369 = vadd.f32 0.0, %v368
    %v370 = vpop.f32.mrb[0].mxu0
    %371 = vmatprep.mubr.f32.mxu0 0.0
    %v372 = vand.u32 %v108, 4294901760
    %v373 = vsub.f32 %v108, %v372
    %v374 = vand.u32 %v373, 4294901760
    %v375 = vsub.f32 %v373, %v374
    %v376 = vand.u32 %v375, 4294901760
    %377 = vmatmul.mubr.f32.gmra.mrb[0].mxu0 %v376
    %v378 = vpop.f32.mrb[0].mxu0
    %v379 = vadd.f32 0.0, %v378
    %v380 = vpop.f32.mrb[0].mxu0
    %381 = vmatprep.mubr.f32.mxu0 0.0
    %v382 = vand.u32 %v111, 4294901760
    %v383 = vsub.f32 %v111, %v382
    %v384 = vand.u32 %v383, 4294901760
    %v385 = vsub.f32 %v383, %v384
    %v386 = vand.u32 %v385, 4294901760
    %387 = vmatmul.mubr.f32.gmra.mrb[0].mxu0 %v386
    %v388 = vpop.f32.mrb[0].mxu0
    %v389 = vadd.f32 0.0, %v388
    %v390 = vpop.f32.mrb[0].mxu0
    %391 = vmatprep.mubr.f32.mxu0 0.0
    %v392 = vand.u32 %v114, 4294901760
    %v393 = vsub.f32 %v114, %v392
    %v394 = vand.u32 %v393, 4294901760
    %v395 = vsub.f32 %v393, %v394
    %v396 = vand.u32 %v395, 4294901760
    %397 = vmatmul.mubr.f32.gmra.mrb[0].mxu0 %v396
    %v398 = vpop.f32.mrb[0].mxu0
    %v399 = vadd.f32 0.0, %v398
    %v400 = vpop.f32.mrb[0].mxu0
    %401 = vmatprep.mubr.f32.mxu0 0.0
    %v402 = vand.u32 %v117, 4294901760
    %v403 = vsub.f32 %v117, %v402
    %v404 = vand.u32 %v403, 4294901760
    %v405 = vsub.f32 %v403, %v404
    %v406 = vand.u32 %v405, 4294901760
    %407 = vmatmul.mubr.f32.gmra.mrb[0].mxu0 %v406
    %v408 = vpop.f32.mrb[0].mxu0
    %v409 = vadd.f32 0.0, %v408
    %v410 = vpop.f32.mrb[0].mxu0
    %411 = vmatprep.mubr.f32.mxu0 0.0
    %v412 = vand.u32 %v120, 4294901760
    %v413 = vsub.f32 %v120, %v412
    %v414 = vand.u32 %v413, 4294901760
    %v415 = vsub.f32 %v413, %v414
    %v416 = vand.u32 %v415, 4294901760
    %417 = vmatmul.mubr.f32.gmra.mrb[0].mxu0 %v416
    %v418 = vpop.f32.mrb[0].mxu0
    %v419 = vadd.f32 0.0, %v418
    %v420 = vpop.f32.mrb[0].mxu0
    %421 = vmatprep.mubr.f32.mxu0 0.0
    %v422 = vand.u32 %v123, 4294901760
    %v423 = vsub.f32 %v123, %v422
    %v424 = vand.u32 %v423, 4294901760
    %v425 = vsub.f32 %v423, %v424
    %v426 = vand.u32 %v425, 4294901760
    %427 = vmatmul.mubr.f32.gmra.mrb[0].mxu0 %v426
    %v428 = vpop.f32.mrb[0].mxu0
    %v429 = vadd.f32 0.0, %v428
    %v430 = vpop.f32.mrb[0].mxu0
    %431 = vmatprep.mubr.f32.mxu0 0.0
    %v432 = vand.u32 %v126, 4294901760
    %v433 = vsub.f32 %v126, %v432
    %v434 = vand.u32 %v433, 4294901760
    %v435 = vsub.f32 %v433, %v434
    %v436 = vand.u32 %v435, 4294901760
    %437 = vmatmul.mubr.f32.gmra.mrb[0].mxu0 %v436
    %v438 = vpop.f32.mrb[0].mxu0
    %v439 = vadd.f32 0.0, %v438
    %v440 = vpop.f32.mrb[0].mxu0
    %441 = vmatprep.mubr.f32.mxu0 0.0
    %v442 = vand.u32 %v129, 4294901760
    %v443 = vsub.f32 %v129, %v442
    %v444 = vand.u32 %v443, 4294901760
    %v445 = vsub.f32 %v443, %v444
    %v446 = vand.u32 %v445, 4294901760
    %447 = vmatmul.mubr.f32.gmra.mrb[0].mxu0 %v446
    %v448 = vpop.f32.mrb[0].mxu0
    %v449 = vadd.f32 0.0, %v448
    %v450 = vpop.f32.mrb[0].mxu0
    %451 = vmatprep.mubr.f32.mxu0 0.0
    %v452 = vand.u32 %v132, 4294901760
    %v453 = vsub.f32 %v132, %v452
    %v454 = vand.u32 %v453, 4294901760
    %v455 = vsub.f32 %v453, %v454
    %v456 = vand.u32 %v455, 4294901760
    %457 = vmatmul.mubr.f32.gmra.mrb[0].mxu0 %v456
    %v458 = vpop.f32.mrb[0].mxu0
    %v459 = vadd.f32 0.0, %v458
    %v460 = vpop.f32.mrb[0].mxu0
    %461 = vmatprep.mubr.f32.mxu0 0.0
    %v462 = vand.u32 %v135, 4294901760
    %v463 = vsub.f32 %v135, %v462
    %v464 = vand.u32 %v463, 4294901760
    %v465 = vsub.f32 %v463, %v464
    %v466 = vand.u32 %v465, 4294901760
    %467 = vmatmul.mubr.f32.gmra.mrb[0].mxu0 %v466
    %v468 = vpop.f32.mrb[0].mxu0
    %v469 = vadd.f32 0.0, %v468
    %v470 = vpop.f32.mrb[0].mxu0
    %471 = vmatprep.mubr.f32.mxu0 0.0
    %v472 = vand.u32 %v138, 4294901760
    %v473 = vsub.f32 %v138, %v472
    %v474 = vand.u32 %v473, 4294901760
    %v475 = vsub.f32 %v473, %v474
    %v476 = vand.u32 %v475, 4294901760
    %477 = vmatmul.mubr.f32.gmra.mrb[0].mxu0 %v476
    %v478 = vpop.f32.mrb[0].mxu0
    %v479 = vadd.f32 0.0, %v478
    %v480 = vpop.f32.mrb[0].mxu0
    %481 = vmatprep.mubr.f32.mxu0 0.0
    %v482 = vand.u32 %v141, 4294901760
    %v483 = vsub.f32 %v141, %v482
    %v484 = vand.u32 %v483, 4294901760
    %v485 = vsub.f32 %v483, %v484
    %v486 = vand.u32 %v485, 4294901760
    %487 = vmatmul.mubr.f32.gmra.mrb[0].mxu0 %v486
    %v488 = vpop.f32.mrb[0].mxu0
    %v489 = vadd.f32 0.0, %v488
    %v490 = vpop.f32.mrb[0].mxu0
    %491 = vmatprep.mubr.f32.mxu0 0.0
    %v492 = vand.u32 %v144, 4294901760
    %v493 = vsub.f32 %v144, %v492
    %v494 = vand.u32 %v493, 4294901760
    %v495 = vsub.f32 %v493, %v494
    %v496 = vand.u32 %v495, 4294901760
    %497 = vmatmul.mubr.f32.gmra.mrb[0].mxu0 %v496
    %v498 = vpop.f32.mrb[0].mxu0
    %v499 = vadd.f32 0.0, %v498
    %v500 = vpop.f32.mrb[0].mxu0
    %501 = vmatprep.mubr.f32.mxu0 0.0
    %v502 = vand.u32 %v147, 4294901760
    %v503 = vsub.f32 %v147, %v502
    %v504 = vand.u32 %v503, 4294901760
    %v505 = vsub.f32 %v503, %v504
    %v506 = vand.u32 %v505, 4294901760
    %507 = vmatmul.mubr.f32.gmra.mrb[0].mxu0 %v506
    %v508 = vpop.f32.mrb[0].mxu0
    %v509 = vadd.f32 0.0, %v508
    %v510 = vpop.f32.mrb[0].mxu0
    %511 = vmatprep.mubr.f32.mxu0 0.0
    %v512 = vand.u32 %v150, 4294901760
    %v513 = vsub.f32 %v150, %v512
    %v514 = vand.u32 %v513, 4294901760
    %v515 = vsub.f32 %v513, %v514
    %v516 = vand.u32 %v515, 4294901760
    %517 = vmatmul.mubr.f32.gmra.mrb[0].mxu0 %v516
    %v518 = vpop.f32.mrb[0].mxu0
    %v519 = vadd.f32 0.0, %v518
    %v520 = vpop.f32.mrb[0].mxu0
    %521 = vmatprep.mubr.f32.mxu0 0.0
    %v522 = vand.u32 %v153, 4294901760
    %v523 = vsub.f32 %v153, %v522
    %v524 = vand.u32 %v523, 4294901760
    %v525 = vsub.f32 %v523, %v524
    %v526 = vand.u32 %v525, 4294901760
    %527 = vmatmul.mubr.f32.gmra.mrb[0].mxu0 %v526
    %v528 = vpop.f32.mrb[0].mxu0
    %v529 = vadd.f32 0.0, %v528
    %v530 = vpop.f32.mrb[0].mxu0
    %531 = vmatprep.mubr.f32.mxu0 0.0
    %v532 = vand.u32 %v156, 4294901760
    %v533 = vsub.f32 %v156, %v532
    %v534 = vand.u32 %v533, 4294901760
    %v535 = vsub.f32 %v533, %v534
    %v536 = vand.u32 %v535, 4294901760
    %537 = vmatmul.mubr.f32.gmra.mrb[0].mxu0 %v536
    %v538 = vpop.f32.mrb[0].mxu0
    %v539 = vadd.f32 0.0, %v538
    %v540 = vpop.f32.mrb[0].mxu0
    %541 = vmatprep.mubr.f32.mxu0 0.0
    %v542 = vand.u32 %v159, 4294901760
    %v543 = vsub.f32 %v159, %v542
    %v544 = vand.u32 %v543, 4294901760
    %v545 = vsub.f32 %v543, %v544
    %v546 = vand.u32 %v545, 4294901760
    %547 = vmatmul.mubr.f32.gmra.mrb[0].mxu0 %v546
    %v548 = vpop.f32.mrb[0].mxu0
    %v549 = vadd.f32 0.0, %v548
    %v550 = vpop.f32.mrb[0].mxu0
    %551 = vdwg.mxu0
    %552 = vmatprep.subr.mxu0 0.0
    %v553 = vand.u32 %v62, 4294901760
    %v554 = vsub.f32 %v62, %v553
    %v555 = vand.u32 %v554, 4294901760
    %v556 = vsub.f32 %v554, %v555
    %v557 = vand.u32 %v556, 4294901760
    %558 = vmatpush1.msra.mxu0 %v557
    %559 = vmatprep.subr.mxu0 0.0
    %v560 = vand.u32 %v163, 4294901760
    %v561 = vsub.f32 %v163, %v560
    %v562 = vand.u32 %v561, 4294901760
    %v563 = vsub.f32 %v561, %v562
    %v564 = vand.u32 %v563, 4294901760
    %565 = vmatpush1.msra.mxu0 %v564
    %566 = vmatprep.subr.mxu0 0.0
    %567 = vmatpush1.msra.mxu0 0.0
    %568 = vmatprep.subr.mxu0 0.0
    %569 = vmatpush1.msra.mxu0 0.0
    %570 = vmatprep.subr.mxu0 0.0
    %571 = vmatpush1.msra.mxu0 0.0
    %572 = vmatprep.subr.mxu0 0.0
    %573 = vmatpush1.msra.mxu0 0.0
    %574 = vmatprep.subr.mxu0 0.0
    %575 = vmatpush1.msra.mxu0 0.0
    %576 = vmatprep.subr.mxu0 0.0
    %577 = vmatpush1.msra.mxu0 0.0
    %578 = vmatprep.subr.mxu0 0.0
    %579 = vmatpush1.msra.mxu0 0.0
    %580 = vmatprep.subr.mxu0 0.0
    %581 = vmatpush1.msra.mxu0 0.0
    %582 = vmatprep.subr.mxu0 0.0
    %583 = vmatpush1.msra.mxu0 0.0
    %584 = vmatprep.subr.mxu0 0.0
    %585 = vmatpush1.msra.mxu0 0.0
    %586 = vmatprep.subr.mxu0 0.0
    %587 = vmatpush1.msra.mxu0 0.0
    %588 = vmatprep.subr.mxu0 0.0
    %589 = vmatpush1.msra.mxu0 0.0
    %590 = vmatprep.subr.mxu0 0.0
    %591 = vmatpush1.msra.mxu0 0.0
    %592 = vmatprep.subr.mxu0 0.0
    %593 = vmatpush1.msra.mxu0 0.0
    %594 = vmatprep.subr.mxu0 0.0
    %595 = vmatpush1.msra.mxu0 0.0
    %596 = vmatprep.subr.mxu0 0.0
    %597 = vmatpush1.msra.mxu0 0.0
    %598 = vmatprep.subr.mxu0 0.0
    %599 = vmatpush1.msra.mxu0 0.0
    %600 = vmatprep.subr.mxu0 0.0
    %601 = vmatpush1.msra.mxu0 0.0
    %602 = vmatprep.subr.mxu0 0.0
    %603 = vmatpush1.msra.mxu0 0.0
    %604 = vmatprep.subr.mxu0 0.0
    %605 = vmatpush1.msra.mxu0 0.0
    %606 = vmatprep.subr.mxu0 0.0
    %607 = vmatpush1.msra.mxu0 0.0
    %608 = vmatprep.subr.mxu0 0.0
    %609 = vmatpush1.msra.mxu0 0.0
    %610 = vmatprep.subr.mxu0 0.0
    %611 = vmatpush1.msra.mxu0 0.0
    %612 = vmatprep.subr.mxu0 0.0
    %613 = vmatpush1.msra.mxu0 0.0
    %614 = vmatprep.subr.mxu0 0.0
    %615 = vmatpush1.msra.mxu0 0.0
    %616 = vmatprep.subr.mxu0 0.0
    %617 = vmatpush1.msra.mxu0 0.0
    %618 = vmatprep.subr.mxu0 0.0
    %619 = vmatpush1.msra.mxu0 0.0
    %620 = vmatprep.subr.mxu0 0.0
    %621 = vmatpush1.msra.mxu0 0.0
    %622 = vmatprep.subr.mxu0 0.0
    %623 = vmatpush1.msra.mxu0 0.0
    %624 = vmatprep.subr.mxu0 0.0
    %625 = vmatpush1.msra.mxu0 0.0
    %626 = vmatprep.mubr.f32.mxu0 0.0
    %v627 = vand.u32 %v66, 4294901760
    %628 = vmatmul.mubr.f32.gmra.mrb[0].mxu0 %v627
    %v629 = vpop.f32.mrb[0].mxu0
    %v630 = vadd.f32 %v239, %v629
    %v631 = vpop.f32.mrb[0].mxu0
    %632 = vmatprep.mubr.f32.mxu0 0.0
    %v633 = vand.u32 %v69, 4294901760
    %634 = vmatmul.mubr.f32.gmra.mrb[0].mxu0 %v633
    %v635 = vpop.f32.mrb[0].mxu0
    %v636 = vadd.f32 %v249, %v635
    %v637 = vpop.f32.mrb[0].mxu0
    %638 = vmatprep.mubr.f32.mxu0 0.0
    %v639 = vand.u32 %v72, 4294901760
    %640 = vmatmul.mubr.f32.gmra.mrb[0].mxu0 %v639
    %v641 = vpop.f32.mrb[0].mxu0
    %v642 = vadd.f32 %v259, %v641
    %v643 = vpop.f32.mrb[0].mxu0
    %644 = vmatprep.mubr.f32.mxu0 0.0
    %v645 = vand.u32 %v75, 4294901760
    %646 = vmatmul.mubr.f32.gmra.mrb[0].mxu0 %v645
    %v647 = vpop.f32.mrb[0].mxu0
    %v648 = vadd.f32 %v269, %v647
    %v649 = vpop.f32.mrb[0].mxu0
    %650 = vmatprep.mubr.f32.mxu0 0.0
    %v651 = vand.u32 %v78, 4294901760
    %652 = vmatmul.mubr.f32.gmra.mrb[0].mxu0 %v651
    %v653 = vpop.f32.mrb[0].mxu0
    %v654 = vadd.f32 %v279, %v653
    %v655 = vpop.f32.mrb[0].mxu0
    %656 = vmatprep.mubr.f32.mxu0 0.0
    %v657 = vand.u32 %v81, 4294901760
    %658 = vmatmul.mubr.f32.gmra.mrb[0].mxu0 %v657
    %v659 = vpop.f32.mrb[0].mxu0
    %v660 = vadd.f32 %v289, %v659
    %v661 = vpop.f32.mrb[0].mxu0
    %662 = vmatprep.mubr.f32.mxu0 0.0
    %v663 = vand.u32 %v84, 4294901760
    %664 = vmatmul.mubr.f32.gmra.mrb[0].mxu0 %v663
    %v665 = vpop.f32.mrb[0].mxu0
    %v666 = vadd.f32 %v299, %v665
    %v667 = vpop.f32.mrb[0].mxu0
    %668 = vmatprep.mubr.f32.mxu0 0.0
    %v669 = vand.u32 %v87, 4294901760
    %670 = vmatmul.mubr.f32.gmra.mrb[0].mxu0 %v669
    %v671 = vpop.f32.mrb[0].mxu0
    %v672 = vadd.f32 %v309, %v671
    %v673 = vpop.f32.mrb[0].mxu0
    %674 = vmatprep.mubr.f32.mxu0 0.0
    %v675 = vand.u32 %v90, 4294901760
    %676 = vmatmul.mubr.f32.gmra.mrb[0].mxu0 %v675
    %v677 = vpop.f32.mrb[0].mxu0
    %v678 = vadd.f32 %v319, %v677
    %v679 = vpop.f32.mrb[0].mxu0
    %680 = vmatprep.mubr.f32.mxu0 0.0
    %v681 = vand.u32 %v93, 4294901760
    %682 = vmatmul.mubr.f32.gmra.mrb[0].mxu0 %v681
    %v683 = vpop.f32.mrb[0].mxu0
    %v684 = vadd.f32 %v329, %v683
    %v685 = vpop.f32.mrb[0].mxu0
    %686 = vmatprep.mubr.f32.mxu0 0.0
    %v687 = vand.u32 %v96, 4294901760
    %688 = vmatmul.mubr.f32.gmra.mrb[0].mxu0 %v687
    %v689 = vpop.f32.mrb[0].mxu0
    %v690 = vadd.f32 %v339, %v689
    %v691 = vpop.f32.mrb[0].mxu0
    %692 = vmatprep.mubr.f32.mxu0 0.0
    %v693 = vand.u32 %v99, 4294901760
    %694 = vmatmul.mubr.f32.gmra.mrb[0].mxu0 %v693
    %v695 = vpop.f32.mrb[0].mxu0
    %v696 = vadd.f32 %v349, %v695
    %v697 = vpop.f32.mrb[0].mxu0
    %698 = vmatprep.mubr.f32.mxu0 0.0
    %v699 = vand.u32 %v102, 4294901760
    %700 = vmatmul.mubr.f32.gmra.mrb[0].mxu0 %v699
    %v701 = vpop.f32.mrb[0].mxu0
    %v702 = vadd.f32 %v359, %v701
    %v703 = vpop.f32.mrb[0].mxu0
    %704 = vmatprep.mubr.f32.mxu0 0.0
    %v705 = vand.u32 %v105, 4294901760
    %706 = vmatmul.mubr.f32.gmra.mrb[0].mxu0 %v705
    %v707 = vpop.f32.mrb[0].mxu0
    %v708 = vadd.f32 %v369, %v707
    %v709 = vpop.f32.mrb[0].mxu0
    %710 = vmatprep.mubr.f32.mxu0 0.0
    %v711 = vand.u32 %v108, 4294901760
    %712 = vmatmul.mubr.f32.gmra.mrb[0].mxu0 %v711
    %v713 = vpop.f32.mrb[0].mxu0
    %v714 = vadd.f32 %v379, %v713
    %v715 = vpop.f32.mrb[0].mxu0
    %716 = vmatprep.mubr.f32.mxu0 0.0
    %v717 = vand.u32 %v111, 4294901760
    %718 = vmatmul.mubr.f32.gmra.mrb[0].mxu0 %v717
    %v719 = vpop.f32.mrb[0].mxu0
    %v720 = vadd.f32 %v389, %v719
    %v721 = vpop.f32.mrb[0].mxu0
    %722 = vmatprep.mubr.f32.mxu0 0.0
    %v723 = vand.u32 %v114, 4294901760
    %724 = vmatmul.mubr.f32.gmra.mrb[0].mxu0 %v723
    %v725 = vpop.f32.mrb[0].mxu0
    %v726 = vadd.f32 %v399, %v725
    %v727 = vpop.f32.mrb[0].mxu0
    %728 = vmatprep.mubr.f32.mxu0 0.0
    %v729 = vand.u32 %v117, 4294901760
    %730 = vmatmul.mubr.f32.gmra.mrb[0].mxu0 %v729
    %v731 = vpop.f32.mrb[0].mxu0
    %v732 = vadd.f32 %v409, %v731
    %v733 = vpop.f32.mrb[0].mxu0
    %734 = vmatprep.mubr.f32.mxu0 0.0
    %v735 = vand.u32 %v120, 4294901760
    %736 = vmatmul.mubr.f32.gmra.mrb[0].mxu0 %v735
    %v737 = vpop.f32.mrb[0].mxu0
    %v738 = vadd.f32 %v419, %v737
    %v739 = vpop.f32.mrb[0].mxu0
    %740 = vmatprep.mubr.f32.mxu0 0.0
    %v741 = vand.u32 %v123, 4294901760
    %742 = vmatmul.mubr.f32.gmra.mrb[0].mxu0 %v741
    %v743 = vpop.f32.mrb[0].mxu0
    %v744 = vadd.f32 %v429, %v743
    %v745 = vpop.f32.mrb[0].mxu0
    %746 = vmatprep.mubr.f32.mxu0 0.0
    %v747 = vand.u32 %v126, 4294901760
    %748 = vmatmul.mubr.f32.gmra.mrb[0].mxu0 %v747
    %v749 = vpop.f32.mrb[0].mxu0
    %v750 = vadd.f32 %v439, %v749
    %v751 = vpop.f32.mrb[0].mxu0
    %752 = vmatprep.mubr.f32.mxu0 0.0
    %v753 = vand.u32 %v129, 4294901760
    %754 = vmatmul.mubr.f32.gmra.mrb[0].mxu0 %v753
    %v755 = vpop.f32.mrb[0].mxu0
    %v756 = vadd.f32 %v449, %v755
    %v757 = vpop.f32.mrb[0].mxu0
    %758 = vmatprep.mubr.f32.mxu0 0.0
    %v759 = vand.u32 %v132, 4294901760
    %760 = vmatmul.mubr.f32.gmra.mrb[0].mxu0 %v759
    %v761 = vpop.f32.mrb[0].mxu0
    %v762 = vadd.f32 %v459, %v761
    %v763 = vpop.f32.mrb[0].mxu0
    %764 = vmatprep.mubr.f32.mxu0 0.0
    %v765 = vand.u32 %v135, 4294901760
    %766 = vmatmul.mubr.f32.gmra.mrb[0].mxu0 %v765
    %v767 = vpop.f32.mrb[0].mxu0
    %v768 = vadd.f32 %v469, %v767
    %v769 = vpop.f32.mrb[0].mxu0
    %770 = vmatprep.mubr.f32.mxu0 0.0
    %v771 = vand.u32 %v138, 4294901760
    %772 = vmatmul.mubr.f32.gmra.mrb[0].mxu0 %v771
    %v773 = vpop.f32.mrb[0].mxu0
    %v774 = vadd.f32 %v479, %v773
    %v775 = vpop.f32.mrb[0].mxu0
    %776 = vmatprep.mubr.f32.mxu0 0.0
    %v777 = vand.u32 %v141, 4294901760
    %778 = vmatmul.mubr.f32.gmra.mrb[0].mxu0 %v777
    %v779 = vpop.f32.mrb[0].mxu0
    %v780 = vadd.f32 %v489, %v779
    %v781 = vpop.f32.mrb[0].mxu0
    %782 = vmatprep.mubr.f32.mxu0 0.0
    %v783 = vand.u32 %v144, 4294901760
    %784 = vmatmul.mubr.f32.gmra.mrb[0].mxu0 %v783
    %v785 = vpop.f32.mrb[0].mxu0
    %v786 = vadd.f32 %v499, %v785
    %v787 = vpop.f32.mrb[0].mxu0
    %788 = vmatprep.mubr.f32.mxu0 0.0
    %v789 = vand.u32 %v147, 4294901760
    %790 = vmatmul.mubr.f32.gmra.mrb[0].mxu0 %v789
    %v791 = vpop.f32.mrb[0].mxu0
    %v792 = vadd.f32 %v509, %v791
    %v793 = vpop.f32.mrb[0].mxu0
    %794 = vmatprep.mubr.f32.mxu0 0.0
    %v795 = vand.u32 %v150, 4294901760
    %796 = vmatmul.mubr.f32.gmra.mrb[0].mxu0 %v795
    %v797 = vpop.f32.mrb[0].mxu0
    %v798 = vadd.f32 %v519, %v797
    %v799 = vpop.f32.mrb[0].mxu0
    %800 = vmatprep.mubr.f32.mxu0 0.0
    %v801 = vand.u32 %v153, 4294901760
    %802 = vmatmul.mubr.f32.gmra.mrb[0].mxu0 %v801
    %v803 = vpop.f32.mrb[0].mxu0
    %v804 = vadd.f32 %v529, %v803
    %v805 = vpop.f32.mrb[0].mxu0
    %806 = vmatprep.mubr.f32.mxu0 0.0
    %v807 = vand.u32 %v156, 4294901760
    %808 = vmatmul.mubr.f32.gmra.mrb[0].mxu0 %v807
    %v809 = vpop.f32.mrb[0].mxu0
    %v810 = vadd.f32 %v539, %v809
    %v811 = vpop.f32.mrb[0].mxu0
    %812 = vmatprep.mubr.f32.mxu0 0.0
    %v813 = vand.u32 %v159, 4294901760
    %814 = vmatmul.mubr.f32.gmra.mrb[0].mxu0 %v813
    %v815 = vpop.f32.mrb[0].mxu0
    %v816 = vadd.f32 %v549, %v815
    %v817 = vpop.f32.mrb[0].mxu0
    %818 = vdwg.mxu0
    %819 = vmatprep.subr.mxu0 0.0
    %v820 = vand.u32 %v62, 4294901760
    %v821 = vsub.f32 %v62, %v820
    %822 = vmatpush1.msra.mxu0 %v821
    %823 = vmatprep.subr.mxu0 0.0
    %v824 = vand.u32 %v163, 4294901760
    %v825 = vsub.f32 %v163, %v824
    %826 = vmatpush1.msra.mxu0 %v825
    %827 = vmatprep.subr.mxu0 0.0
    %828 = vmatpush1.msra.mxu0 0.0
    %829 = vmatprep.subr.mxu0 0.0
    %830 = vmatpush1.msra.mxu0 0.0
    %831 = vmatprep.subr.mxu0 0.0
    %832 = vmatpush1.msra.mxu0 0.0
    %833 = vmatprep.subr.mxu0 0.0
    %834 = vmatpush1.msra.mxu0 0.0
    %835 = vmatprep.subr.mxu0 0.0
    %836 = vmatpush1.msra.mxu0 0.0
    %837 = vmatprep.subr.mxu0 0.0
    %838 = vmatpush1.msra.mxu0 0.0
    %839 = vmatprep.subr.mxu0 0.0
    %840 = vmatpush1.msra.mxu0 0.0
    %841 = vmatprep.subr.mxu0 0.0
    %842 = vmatpush1.msra.mxu0 0.0
    %843 = vmatprep.subr.mxu0 0.0
    %844 = vmatpush1.msra.mxu0 0.0
    %845 = vmatprep.subr.mxu0 0.0
    %846 = vmatpush1.msra.mxu0 0.0
    %847 = vmatprep.subr.mxu0 0.0
    %848 = vmatpush1.msra.mxu0 0.0
    %849 = vmatprep.subr.mxu0 0.0
    %850 = vmatpush1.msra.mxu0 0.0
    %851 = vmatprep.subr.mxu0 0.0
    %852 = vmatpush1.msra.mxu0 0.0
    %853 = vmatprep.subr.mxu0 0.0
    %854 = vmatpush1.msra.mxu0 0.0
    %855 = vmatprep.subr.mxu0 0.0
    %856 = vmatpush1.msra.mxu0 0.0
    %857 = vmatprep.subr.mxu0 0.0
    %858 = vmatpush1.msra.mxu0 0.0
    %859 = vmatprep.subr.mxu0 0.0
    %860 = vmatpush1.msra.mxu0 0.0
    %861 = vmatprep.subr.mxu0 0.0
    %862 = vmatpush1.msra.mxu0 0.0
    %863 = vmatprep.subr.mxu0 0.0
    %864 = vmatpush1.msra.mxu0 0.0
    %865 = vmatprep.subr.mxu0 0.0
    %866 = vmatpush1.msra.mxu0 0.0
    %867 = vmatprep.subr.mxu0 0.0
    %868 = vmatpush1.msra.mxu0 0.0
    %869 = vmatprep.subr.mxu0 0.0
    %870 = vmatpush1.msra.mxu0 0.0
    %871 = vmatprep.subr.mxu0 0.0
    %872 = vmatpush1.msra.mxu0 0.0
    %873 = vmatprep.subr.mxu0 0.0
    %874 = vmatpush1.msra.mxu0 0.0
    %875 = vmatprep.subr.mxu0 0.0
    %876 = vmatpush1.msra.mxu0 0.0
    %877 = vmatprep.subr.mxu0 0.0
    %878 = vmatpush1.msra.mxu0 0.0
    %879 = vmatprep.subr.mxu0 0.0
    %880 = vmatpush1.msra.mxu0 0.0
    %881 = vmatprep.subr.mxu0 0.0
    %882 = vmatpush1.msra.mxu0 0.0
    %883 = vmatprep.subr.mxu0 0.0
    %884 = vmatpush1.msra.mxu0 0.0
    %885 = vmatprep.subr.mxu0 0.0
    %886 = vmatpush1.msra.mxu0 0.0
    %887 = vmatprep.mubr.f32.mxu0 0.0
    %v888 = vand.u32 %v66, 4294901760
    %v889 = vsub.f32 %v66, %v888
    %890 = vmatmul.mubr.f32.gmra.mrb[0].mxu0 %v889
    %v891 = vpop.f32.mrb[0].mxu0
    %v892 = vadd.f32 %v630, %v891
    %v893 = vpop.f32.mrb[0].mxu0
    %894 = vmatprep.mubr.f32.mxu0 0.0
    %v895 = vand.u32 %v69, 4294901760
    %v896 = vsub.f32 %v69, %v895
    %897 = vmatmul.mubr.f32.gmra.mrb[0].mxu0 %v896
    %v898 = vpop.f32.mrb[0].mxu0
    %v899 = vadd.f32 %v636, %v898
    %v900 = vpop.f32.mrb[0].mxu0
    %901 = vmatprep.mubr.f32.mxu0 0.0
    %v902 = vand.u32 %v72, 4294901760
    %v903 = vsub.f32 %v72, %v902
    %904 = vmatmul.mubr.f32.gmra.mrb[0].mxu0 %v903
    %v905 = vpop.f32.mrb[0].mxu0
    %v906 = vadd.f32 %v642, %v905
    %v907 = vpop.f32.mrb[0].mxu0
    %908 = vmatprep.mubr.f32.mxu0 0.0
    %v909 = vand.u32 %v75, 4294901760
    %v910 = vsub.f32 %v75, %v909
    %911 = vmatmul.mubr.f32.gmra.mrb[0].mxu0 %v910
    %v912 = vpop.f32.mrb[0].mxu0
    %v913 = vadd.f32 %v648, %v912
    %v914 = vpop.f32.mrb[0].mxu0
    %915 = vmatprep.mubr.f32.mxu0 0.0
    %v916 = vand.u32 %v78, 4294901760
    %v917 = vsub.f32 %v78, %v916
    %918 = vmatmul.mubr.f32.gmra.mrb[0].mxu0 %v917
    %v919 = vpop.f32.mrb[0].mxu0
    %v920 = vadd.f32 %v654, %v919
    %v921 = vpop.f32.mrb[0].mxu0
    %922 = vmatprep.mubr.f32.mxu0 0.0
    %v923 = vand.u32 %v81, 4294901760
    %v924 = vsub.f32 %v81, %v923
    %925 = vmatmul.mubr.f32.gmra.mrb[0].mxu0 %v924
    %v926 = vpop.f32.mrb[0].mxu0
    %v927 = vadd.f32 %v660, %v926
    %v928 = vpop.f32.mrb[0].mxu0
    %929 = vmatprep.mubr.f32.mxu0 0.0
    %v930 = vand.u32 %v84, 4294901760
    %v931 = vsub.f32 %v84, %v930
    %932 = vmatmul.mubr.f32.gmra.mrb[0].mxu0 %v931
    %v933 = vpop.f32.mrb[0].mxu0
    %v934 = vadd.f32 %v666, %v933
    %v935 = vpop.f32.mrb[0].mxu0
    %936 = vmatprep.mubr.f32.mxu0 0.0
    %v937 = vand.u32 %v87, 4294901760
    %v938 = vsub.f32 %v87, %v937
    %939 = vmatmul.mubr.f32.gmra.mrb[0].mxu0 %v938
    %v940 = vpop.f32.mrb[0].mxu0
    %v941 = vadd.f32 %v672, %v940
    %v942 = vpop.f32.mrb[0].mxu0
    %943 = vmatprep.mubr.f32.mxu0 0.0
    %v944 = vand.u32 %v90, 4294901760
    %v945 = vsub.f32 %v90, %v944
    %946 = vmatmul.mubr.f32.gmra.mrb[0].mxu0 %v945
    %v947 = vpop.f32.mrb[0].mxu0
    %v948 = vadd.f32 %v678, %v947
    %v949 = vpop.f32.mrb[0].mxu0
    %950 = vmatprep.mubr.f32.mxu0 0.0
    %v951 = vand.u32 %v93, 4294901760
    %v952 = vsub.f32 %v93, %v951
    %953 = vmatmul.mubr.f32.gmra.mrb[0].mxu0 %v952
    %v954 = vpop.f32.mrb[0].mxu0
    %v955 = vadd.f32 %v684, %v954
    %v956 = vpop.f32.mrb[0].mxu0
    %957 = vmatprep.mubr.f32.mxu0 0.0
    %v958 = vand.u32 %v96, 4294901760
    %v959 = vsub.f32 %v96, %v958
    %960 = vmatmul.mubr.f32.gmra.mrb[0].mxu0 %v959
    %v961 = vpop.f32.mrb[0].mxu0
    %v962 = vadd.f32 %v690, %v961
    %v963 = vpop.f32.mrb[0].mxu0
    %964 = vmatprep.mubr.f32.mxu0 0.0
    %v965 = vand.u32 %v99, 4294901760
    %v966 = vsub.f32 %v99, %v965
    %967 = vmatmul.mubr.f32.gmra.mrb[0].mxu0 %v966
    %v968 = vpop.f32.mrb[0].mxu0
    %v969 = vadd.f32 %v696, %v968
    %v970 = vpop.f32.mrb[0].mxu0
    %971 = vmatprep.mubr.f32.mxu0 0.0
    %v972 = vand.u32 %v102, 4294901760
    %v973 = vsub.f32 %v102, %v972
    %974 = vmatmul.mubr.f32.gmra.mrb[0].mxu0 %v973
    %v975 = vpop.f32.mrb[0].mxu0
    %v976 = vadd.f32 %v702, %v975
    %v977 = vpop.f32.mrb[0].mxu0
    %978 = vmatprep.mubr.f32.mxu0 0.0
    %v979 = vand.u32 %v105, 4294901760
    %v980 = vsub.f32 %v105, %v979
    %981 = vmatmul.mubr.f32.gmra.mrb[0].mxu0 %v980
    %v982 = vpop.f32.mrb[0].mxu0
    %v983 = vadd.f32 %v708, %v982
    %v984 = vpop.f32.mrb[0].mxu0
    %985 = vmatprep.mubr.f32.mxu0 0.0
    %v986 = vand.u32 %v108, 4294901760
    %v987 = vsub.f32 %v108, %v986
    %988 = vmatmul.mubr.f32.gmra.mrb[0].mxu0 %v987
    %v989 = vpop.f32.mrb[0].mxu0
    %v990 = vadd.f32 %v714, %v989
    %v991 = vpop.f32.mrb[0].mxu0
    %992 = vmatprep.mubr.f32.mxu0 0.0
    %v993 = vand.u32 %v111, 4294901760
    %v994 = vsub.f32 %v111, %v993
    %995 = vmatmul.mubr.f32.gmra.mrb[0].mxu0 %v994
    %v996 = vpop.f32.mrb[0].mxu0
    %v997 = vadd.f32 %v720, %v996
    %v998 = vpop.f32.mrb[0].mxu0
    %999 = vmatprep.mubr.f32.mxu0 0.0
    %v1000 = vand.u32 %v114, 4294901760
    %v1001 = vsub.f32 %v114, %v1000
    %1002 = vmatmul.mubr.f32.gmra.mrb[0].mxu0 %v1001
    %v1003 = vpop.f32.mrb[0].mxu0
    %v1004 = vadd.f32 %v726, %v1003
    %v1005 = vpop.f32.mrb[0].mxu0
    %1006 = vmatprep.mubr.f32.mxu0 0.0
    %v1007 = vand.u32 %v117, 4294901760
    %v1008 = vsub.f32 %v117, %v1007
    %1009 = vmatmul.mubr.f32.gmra.mrb[0].mxu0 %v1008
    %v1010 = vpop.f32.mrb[0].mxu0
    %v1011 = vadd.f32 %v732, %v1010
    %v1012 = vpop.f32.mrb[0].mxu0
    %1013 = vmatprep.mubr.f32.mxu0 0.0
    %v1014 = vand.u32 %v120, 4294901760
    %v1015 = vsub.f32 %v120, %v1014
    %1016 = vmatmul.mubr.f32.gmra.mrb[0].mxu0 %v1015
    %v1017 = vpop.f32.mrb[0].mxu0
    %v1018 = vadd.f32 %v738, %v1017
    %v1019 = vpop.f32.mrb[0].mxu0
    %1020 = vmatprep.mubr.f32.mxu0 0.0
    %v1021 = vand.u32 %v123, 4294901760
    %v1022 = vsub.f32 %v123, %v1021
    %1023 = vmatmul.mubr.f32.gmra.mrb[0].mxu0 %v1022
    %v1024 = vpop.f32.mrb[0].mxu0
    %v1025 = vadd.f32 %v744, %v1024
    %v1026 = vpop.f32.mrb[0].mxu0
    %1027 = vmatprep.mubr.f32.mxu0 0.0
    %v1028 = vand.u32 %v126, 4294901760
    %v1029 = vsub.f32 %v126, %v1028
    %1030 = vmatmul.mubr.f32.gmra.mrb[0].mxu0 %v1029
    %v1031 = vpop.f32.mrb[0].mxu0
    %v1032 = vadd.f32 %v750, %v1031
    %v1033 = vpop.f32.mrb[0].mxu0
    %1034 = vmatprep.mubr.f32.mxu0 0.0
    %v1035 = vand.u32 %v129, 4294901760
    %v1036 = vsub.f32 %v129, %v1035
    %1037 = vmatmul.mubr.f32.gmra.mrb[0].mxu0 %v1036
    %v1038 = vpop.f32.mrb[0].mxu0
    %v1039 = vadd.f32 %v756, %v1038
    %v1040 = vpop.f32.mrb[0].mxu0
    %1041 = vmatprep.mubr.f32.mxu0 0.0
    %v1042 = vand.u32 %v132, 4294901760
    %v1043 = vsub.f32 %v132, %v1042
    %1044 = vmatmul.mubr.f32.gmra.mrb[0].mxu0 %v1043
    %v1045 = vpop.f32.mrb[0].mxu0
    %v1046 = vadd.f32 %v762, %v1045
    %v1047 = vpop.f32.mrb[0].mxu0
    %1048 = vmatprep.mubr.f32.mxu0 0.0
    %v1049 = vand.u32 %v135, 4294901760
    %v1050 = vsub.f32 %v135, %v1049
    %1051 = vmatmul.mubr.f32.gmra.mrb[0].mxu0 %v1050
    %v1052 = vpop.f32.mrb[0].mxu0
    %v1053 = vadd.f32 %v768, %v1052
    %v1054 = vpop.f32.mrb[0].mxu0
    %1055 = vmatprep.mubr.f32.mxu0 0.0
    %v1056 = vand.u32 %v138, 4294901760
    %v1057 = vsub.f32 %v138, %v1056
    %1058 = vmatmul.mubr.f32.gmra.mrb[0].mxu0 %v1057
    %v1059 = vpop.f32.mrb[0].mxu0
    %v1060 = vadd.f32 %v774, %v1059
    %v1061 = vpop.f32.mrb[0].mxu0
    %1062 = vmatprep.mubr.f32.mxu0 0.0
    %v1063 = vand.u32 %v141, 4294901760
    %v1064 = vsub.f32 %v141, %v1063
    %1065 = vmatmul.mubr.f32.gmra.mrb[0].mxu0 %v1064
    %v1066 = vpop.f32.mrb[0].mxu0
    %v1067 = vadd.f32 %v780, %v1066
    %v1068 = vpop.f32.mrb[0].mxu0
    %1069 = vmatprep.mubr.f32.mxu0 0.0
    %v1070 = vand.u32 %v144, 4294901760
    %v1071 = vsub.f32 %v144, %v1070
    %1072 = vmatmul.mubr.f32.gmra.mrb[0].mxu0 %v1071
    %v1073 = vpop.f32.mrb[0].mxu0
    %v1074 = vadd.f32 %v786, %v1073
    %v1075 = vpop.f32.mrb[0].mxu0
    %1076 = vmatprep.mubr.f32.mxu0 0.0
    %v1077 = vand.u32 %v147, 4294901760
    %v1078 = vsub.f32 %v147, %v1077
    %1079 = vmatmul.mubr.f32.gmra.mrb[0].mxu0 %v1078
    %v1080 = vpop.f32.mrb[0].mxu0
    %v1081 = vadd.f32 %v792, %v1080
    %v1082 = vpop.f32.mrb[0].mxu0
    %1083 = vmatprep.mubr.f32.mxu0 0.0
    %v1084 = vand.u32 %v150, 4294901760
    %v1085 = vsub.f32 %v150, %v1084
    %1086 = vmatmul.mubr.f32.gmra.mrb[0].mxu0 %v1085
    %v1087 = vpop.f32.mrb[0].mxu0
    %v1088 = vadd.f32 %v798, %v1087
    %v1089 = vpop.f32.mrb[0].mxu0
    %1090 = vmatprep.mubr.f32.mxu0 0.0
    %v1091 = vand.u32 %v153, 4294901760
    %v1092 = vsub.f32 %v153, %v1091
    %1093 = vmatmul.mubr.f32.gmra.mrb[0].mxu0 %v1092
    %v1094 = vpop.f32.mrb[0].mxu0
    %v1095 = vadd.f32 %v804, %v1094
    %v1096 = vpop.f32.mrb[0].mxu0
    %1097 = vmatprep.mubr.f32.mxu0 0.0
    %v1098 = vand.u32 %v156, 4294901760
    %v1099 = vsub.f32 %v156, %v1098
    %1100 = vmatmul.mubr.f32.gmra.mrb[0].mxu0 %v1099
    %v1101 = vpop.f32.mrb[0].mxu0
    %v1102 = vadd.f32 %v810, %v1101
    %v1103 = vpop.f32.mrb[0].mxu0
    %1104 = vmatprep.mubr.f32.mxu0 0.0
    %v1105 = vand.u32 %v159, 4294901760
    %v1106 = vsub.f32 %v159, %v1105
    %1107 = vmatmul.mubr.f32.gmra.mrb[0].mxu0 %v1106
    %v1108 = vpop.f32.mrb[0].mxu0
    %v1109 = vadd.f32 %v816, %v1108
    %v1110 = vpop.f32.mrb[0].mxu0
    %1111 = vdwg.mxu0
    %1112 = vmatprep.subr.mxu0 0.0
    %v1113 = vand.u32 %v62, 4294901760
    %1114 = vmatpush1.msra.mxu0 %v1113
    %1115 = vmatprep.subr.mxu0 0.0
    %v1116 = vand.u32 %v163, 4294901760
    %1117 = vmatpush1.msra.mxu0 %v1116
    %1118 = vmatprep.subr.mxu0 0.0
    %1119 = vmatpush1.msra.mxu0 0.0
    %1120 = vmatprep.subr.mxu0 0.0
    %1121 = vmatpush1.msra.mxu0 0.0
    %1122 = vmatprep.subr.mxu0 0.0
    %1123 = vmatpush1.msra.mxu0 0.0
    %1124 = vmatprep.subr.mxu0 0.0
    %1125 = vmatpush1.msra.mxu0 0.0
    %1126 = vmatprep.subr.mxu0 0.0
    %1127 = vmatpush1.msra.mxu0 0.0
    %1128 = vmatprep.subr.mxu0 0.0
    %1129 = vmatpush1.msra.mxu0 0.0
    %1130 = vmatprep.subr.mxu0 0.0
    %1131 = vmatpush1.msra.mxu0 0.0
    %1132 = vmatprep.subr.mxu0 0.0
    %1133 = vmatpush1.msra.mxu0 0.0
    %1134 = vmatprep.subr.mxu0 0.0
    %1135 = vmatpush1.msra.mxu0 0.0
    %1136 = vmatprep.subr.mxu0 0.0
    %1137 = vmatpush1.msra.mxu0 0.0
    %1138 = vmatprep.subr.mxu0 0.0
    %1139 = vmatpush1.msra.mxu0 0.0
    %1140 = vmatprep.subr.mxu0 0.0
    %1141 = vmatpush1.msra.mxu0 0.0
    %1142 = vmatprep.subr.mxu0 0.0
    %1143 = vmatpush1.msra.mxu0 0.0
    %1144 = vmatprep.subr.mxu0 0.0
    %1145 = vmatpush1.msra.mxu0 0.0
    %1146 = vmatprep.subr.mxu0 0.0
    %1147 = vmatpush1.msra.mxu0 0.0
    %1148 = vmatprep.subr.mxu0 0.0
    %1149 = vmatpush1.msra.mxu0 0.0
    %1150 = vmatprep.subr.mxu0 0.0
    %1151 = vmatpush1.msra.mxu0 0.0
    %1152 = vmatprep.subr.mxu0 0.0
    %1153 = vmatpush1.msra.mxu0 0.0
    %1154 = vmatprep.subr.mxu0 0.0
    %1155 = vmatpush1.msra.mxu0 0.0
    %1156 = vmatprep.subr.mxu0 0.0
    %1157 = vmatpush1.msra.mxu0 0.0
    %1158 = vmatprep.subr.mxu0 0.0
    %1159 = vmatpush1.msra.mxu0 0.0
    %1160 = vmatprep.subr.mxu0 0.0
    %1161 = vmatpush1.msra.mxu0 0.0
    %1162 = vmatprep.subr.mxu0 0.0
    %1163 = vmatpush1.msra.mxu0 0.0
    %1164 = vmatprep.subr.mxu0 0.0
    %1165 = vmatpush1.msra.mxu0 0.0
    %1166 = vmatprep.subr.mxu0 0.0
    %1167 = vmatpush1.msra.mxu0 0.0
    %1168 = vmatprep.subr.mxu0 0.0
    %1169 = vmatpush1.msra.mxu0 0.0
    %1170 = vmatprep.subr.mxu0 0.0
    %1171 = vmatpush1.msra.mxu0 0.0
    %1172 = vmatprep.subr.mxu0 0.0
    %1173 = vmatpush1.msra.mxu0 0.0
    %1174 = vmatprep.subr.mxu0 0.0
    %1175 = vmatpush1.msra.mxu0 0.0
    %1176 = vmatprep.subr.mxu0 0.0
    %1177 = vmatpush1.msra.mxu0 0.0
    %1178 = vmatprep.mubr.f32.mxu0 0.0
    %v1179 = vand.u32 %v66, 4294901760
    %v1180 = vsub.f32 %v66, %v1179
    %v1181 = vand.u32 %v1180, 4294901760
    %1182 = vmatmul.mubr.f32.gmra.mrb[0].mxu0 %v1181
    %v1183 = vpop.f32.mrb[0].mxu0
    %v1184 = vadd.f32 %v892, %v1183
    %v1185 = vpop.f32.mrb[0].mxu0
    %1186 = vmatprep.mubr.f32.mxu0 0.0
    %v1187 = vand.u32 %v69, 4294901760
    %v1188 = vsub.f32 %v69, %v1187
    %v1189 = vand.u32 %v1188, 4294901760
    %1190 = vmatmul.mubr.f32.gmra.mrb[0].mxu0 %v1189
    %v1191 = vpop.f32.mrb[0].mxu0
    %v1192 = vadd.f32 %v899, %v1191
    %v1193 = vpop.f32.mrb[0].mxu0
    %1194 = vmatprep.mubr.f32.mxu0 0.0
    %v1195 = vand.u32 %v72, 4294901760
    %v1196 = vsub.f32 %v72, %v1195
    %v1197 = vand.u32 %v1196, 4294901760
    %1198 = vmatmul.mubr.f32.gmra.mrb[0].mxu0 %v1197
    %v1199 = vpop.f32.mrb[0].mxu0
    %v1200 = vadd.f32 %v906, %v1199
    %v1201 = vpop.f32.mrb[0].mxu0
    %1202 = vmatprep.mubr.f32.mxu0 0.0
    %v1203 = vand.u32 %v75, 4294901760
    %v1204 = vsub.f32 %v75, %v1203
    %v1205 = vand.u32 %v1204, 4294901760
    %1206 = vmatmul.mubr.f32.gmra.mrb[0].mxu0 %v1205
    %v1207 = vpop.f32.mrb[0].mxu0
    %v1208 = vadd.f32 %v913, %v1207
    %v1209 = vpop.f32.mrb[0].mxu0
    %1210 = vmatprep.mubr.f32.mxu0 0.0
    %v1211 = vand.u32 %v78, 4294901760
    %v1212 = vsub.f32 %v78, %v1211
    %v1213 = vand.u32 %v1212, 4294901760
    %1214 = vmatmul.mubr.f32.gmra.mrb[0].mxu0 %v1213
    %v1215 = vpop.f32.mrb[0].mxu0
    %v1216 = vadd.f32 %v920, %v1215
    %v1217 = vpop.f32.mrb[0].mxu0
    %1218 = vmatprep.mubr.f32.mxu0 0.0
    %v1219 = vand.u32 %v81, 4294901760
    %v1220 = vsub.f32 %v81, %v1219
    %v1221 = vand.u32 %v1220, 4294901760
    %1222 = vmatmul.mubr.f32.gmra.mrb[0].mxu0 %v1221
    %v1223 = vpop.f32.mrb[0].mxu0
    %v1224 = vadd.f32 %v927, %v1223
    %v1225 = vpop.f32.mrb[0].mxu0
    %1226 = vmatprep.mubr.f32.mxu0 0.0
    %v1227 = vand.u32 %v84, 4294901760
    %v1228 = vsub.f32 %v84, %v1227
    %v1229 = vand.u32 %v1228, 4294901760
    %1230 = vmatmul.mubr.f32.gmra.mrb[0].mxu0 %v1229
    %v1231 = vpop.f32.mrb[0].mxu0
    %v1232 = vadd.f32 %v934, %v1231
    %v1233 = vpop.f32.mrb[0].mxu0
    %1234 = vmatprep.mubr.f32.mxu0 0.0
    %v1235 = vand.u32 %v87, 4294901760
    %v1236 = vsub.f32 %v87, %v1235
    %v1237 = vand.u32 %v1236, 4294901760
    %1238 = vmatmul.mubr.f32.gmra.mrb[0].mxu0 %v1237
    %v1239 = vpop.f32.mrb[0].mxu0
    %v1240 = vadd.f32 %v941, %v1239
    %v1241 = vpop.f32.mrb[0].mxu0
    %1242 = vmatprep.mubr.f32.mxu0 0.0
    %v1243 = vand.u32 %v90, 4294901760
    %v1244 = vsub.f32 %v90, %v1243
    %v1245 = vand.u32 %v1244, 4294901760
    %1246 = vmatmul.mubr.f32.gmra.mrb[0].mxu0 %v1245
    %v1247 = vpop.f32.mrb[0].mxu0
    %v1248 = vadd.f32 %v948, %v1247
    %v1249 = vpop.f32.mrb[0].mxu0
    %1250 = vmatprep.mubr.f32.mxu0 0.0
    %v1251 = vand.u32 %v93, 4294901760
    %v1252 = vsub.f32 %v93, %v1251
    %v1253 = vand.u32 %v1252, 4294901760
    %1254 = vmatmul.mubr.f32.gmra.mrb[0].mxu0 %v1253
    %v1255 = vpop.f32.mrb[0].mxu0
    %v1256 = vadd.f32 %v955, %v1255
    %v1257 = vpop.f32.mrb[0].mxu0
    %1258 = vmatprep.mubr.f32.mxu0 0.0
    %v1259 = vand.u32 %v96, 4294901760
    %v1260 = vsub.f32 %v96, %v1259
    %v1261 = vand.u32 %v1260, 4294901760
    %1262 = vmatmul.mubr.f32.gmra.mrb[0].mxu0 %v1261
    %v1263 = vpop.f32.mrb[0].mxu0
    %v1264 = vadd.f32 %v962, %v1263
    %v1265 = vpop.f32.mrb[0].mxu0
    %1266 = vmatprep.mubr.f32.mxu0 0.0
    %v1267 = vand.u32 %v99, 4294901760
    %v1268 = vsub.f32 %v99, %v1267
    %v1269 = vand.u32 %v1268, 4294901760
    %1270 = vmatmul.mubr.f32.gmra.mrb[0].mxu0 %v1269
    %v1271 = vpop.f32.mrb[0].mxu0
    %v1272 = vadd.f32 %v969, %v1271
    %v1273 = vpop.f32.mrb[0].mxu0
    %1274 = vmatprep.mubr.f32.mxu0 0.0
    %v1275 = vand.u32 %v102, 4294901760
    %v1276 = vsub.f32 %v102, %v1275
    %v1277 = vand.u32 %v1276, 4294901760
    %1278 = vmatmul.mubr.f32.gmra.mrb[0].mxu0 %v1277
    %v1279 = vpop.f32.mrb[0].mxu0
    %v1280 = vadd.f32 %v976, %v1279
    %v1281 = vpop.f32.mrb[0].mxu0
    %1282 = vmatprep.mubr.f32.mxu0 0.0
    %v1283 = vand.u32 %v105, 4294901760
    %v1284 = vsub.f32 %v105, %v1283
    %v1285 = vand.u32 %v1284, 4294901760
    %1286 = vmatmul.mubr.f32.gmra.mrb[0].mxu0 %v1285
    %v1287 = vpop.f32.mrb[0].mxu0
    %v1288 = vadd.f32 %v983, %v1287
    %v1289 = vpop.f32.mrb[0].mxu0
    %1290 = vmatprep.mubr.f32.mxu0 0.0
    %v1291 = vand.u32 %v108, 4294901760
    %v1292 = vsub.f32 %v108, %v1291
    %v1293 = vand.u32 %v1292, 4294901760
    %1294 = vmatmul.mubr.f32.gmra.mrb[0].mxu0 %v1293
    %v1295 = vpop.f32.mrb[0].mxu0
    %v1296 = vadd.f32 %v990, %v1295
    %v1297 = vpop.f32.mrb[0].mxu0
    %1298 = vmatprep.mubr.f32.mxu0 0.0
    %v1299 = vand.u32 %v111, 4294901760
    %v1300 = vsub.f32 %v111, %v1299
    %v1301 = vand.u32 %v1300, 4294901760
    %1302 = vmatmul.mubr.f32.gmra.mrb[0].mxu0 %v1301
    %v1303 = vpop.f32.mrb[0].mxu0
    %v1304 = vadd.f32 %v997, %v1303
    %v1305 = vpop.f32.mrb[0].mxu0
    %1306 = vmatprep.mubr.f32.mxu0 0.0
    %v1307 = vand.u32 %v114, 4294901760
    %v1308 = vsub.f32 %v114, %v1307
    %v1309 = vand.u32 %v1308, 4294901760
    %1310 = vmatmul.mubr.f32.gmra.mrb[0].mxu0 %v1309
    %v1311 = vpop.f32.mrb[0].mxu0
    %v1312 = vadd.f32 %v1004, %v1311
    %v1313 = vpop.f32.mrb[0].mxu0
    %1314 = vmatprep.mubr.f32.mxu0 0.0
    %v1315 = vand.u32 %v117, 4294901760
    %v1316 = vsub.f32 %v117, %v1315
    %v1317 = vand.u32 %v1316, 4294901760
    %1318 = vmatmul.mubr.f32.gmra.mrb[0].mxu0 %v1317
    %v1319 = vpop.f32.mrb[0].mxu0
    %v1320 = vadd.f32 %v1011, %v1319
    %v1321 = vpop.f32.mrb[0].mxu0
    %1322 = vmatprep.mubr.f32.mxu0 0.0
    %v1323 = vand.u32 %v120, 4294901760
    %v1324 = vsub.f32 %v120, %v1323
    %v1325 = vand.u32 %v1324, 4294901760
    %1326 = vmatmul.mubr.f32.gmra.mrb[0].mxu0 %v1325
    %v1327 = vpop.f32.mrb[0].mxu0
    %v1328 = vadd.f32 %v1018, %v1327
    %v1329 = vpop.f32.mrb[0].mxu0
    %1330 = vmatprep.mubr.f32.mxu0 0.0
    %v1331 = vand.u32 %v123, 4294901760
    %v1332 = vsub.f32 %v123, %v1331
    %v1333 = vand.u32 %v1332, 4294901760
    %1334 = vmatmul.mubr.f32.gmra.mrb[0].mxu0 %v1333
    %v1335 = vpop.f32.mrb[0].mxu0
    %v1336 = vadd.f32 %v1025, %v1335
    %v1337 = vpop.f32.mrb[0].mxu0
    %1338 = vmatprep.mubr.f32.mxu0 0.0
    %v1339 = vand.u32 %v126, 4294901760
    %v1340 = vsub.f32 %v126, %v1339
    %v1341 = vand.u32 %v1340, 4294901760
    %1342 = vmatmul.mubr.f32.gmra.mrb[0].mxu0 %v1341
    %v1343 = vpop.f32.mrb[0].mxu0
    %v1344 = vadd.f32 %v1032, %v1343
    %v1345 = vpop.f32.mrb[0].mxu0
    %1346 = vmatprep.mubr.f32.mxu0 0.0
    %v1347 = vand.u32 %v129, 4294901760
    %v1348 = vsub.f32 %v129, %v1347
    %v1349 = vand.u32 %v1348, 4294901760
    %1350 = vmatmul.mubr.f32.gmra.mrb[0].mxu0 %v1349
    %v1351 = vpop.f32.mrb[0].mxu0
    %v1352 = vadd.f32 %v1039, %v1351
    %v1353 = vpop.f32.mrb[0].mxu0
    %1354 = vmatprep.mubr.f32.mxu0 0.0
    %v1355 = vand.u32 %v132, 4294901760
    %v1356 = vsub.f32 %v132, %v1355
    %v1357 = vand.u32 %v1356, 4294901760
    %1358 = vmatmul.mubr.f32.gmra.mrb[0].mxu0 %v1357
    %v1359 = vpop.f32.mrb[0].mxu0
    %v1360 = vadd.f32 %v1046, %v1359
    %v1361 = vpop.f32.mrb[0].mxu0
    %1362 = vmatprep.mubr.f32.mxu0 0.0
    %v1363 = vand.u32 %v135, 4294901760
    %v1364 = vsub.f32 %v135, %v1363
    %v1365 = vand.u32 %v1364, 4294901760
    %1366 = vmatmul.mubr.f32.gmra.mrb[0].mxu0 %v1365
    %v1367 = vpop.f32.mrb[0].mxu0
    %v1368 = vadd.f32 %v1053, %v1367
    %v1369 = vpop.f32.mrb[0].mxu0
    %1370 = vmatprep.mubr.f32.mxu0 0.0
    %v1371 = vand.u32 %v138, 4294901760
    %v1372 = vsub.f32 %v138, %v1371
    %v1373 = vand.u32 %v1372, 4294901760
    %1374 = vmatmul.mubr.f32.gmra.mrb[0].mxu0 %v1373
    %v1375 = vpop.f32.mrb[0].mxu0
    %v1376 = vadd.f32 %v1060, %v1375
    %v1377 = vpop.f32.mrb[0].mxu0
    %1378 = vmatprep.mubr.f32.mxu0 0.0
    %v1379 = vand.u32 %v141, 4294901760
    %v1380 = vsub.f32 %v141, %v1379
    %v1381 = vand.u32 %v1380, 4294901760
    %1382 = vmatmul.mubr.f32.gmra.mrb[0].mxu0 %v1381
    %v1383 = vpop.f32.mrb[0].mxu0
    %v1384 = vadd.f32 %v1067, %v1383
    %v1385 = vpop.f32.mrb[0].mxu0
    %1386 = vmatprep.mubr.f32.mxu0 0.0
    %v1387 = vand.u32 %v144, 4294901760
    %v1388 = vsub.f32 %v144, %v1387
    %v1389 = vand.u32 %v1388, 4294901760
    %1390 = vmatmul.mubr.f32.gmra.mrb[0].mxu0 %v1389
    %v1391 = vpop.f32.mrb[0].mxu0
    %v1392 = vadd.f32 %v1074, %v1391
    %v1393 = vpop.f32.mrb[0].mxu0
    %1394 = vmatprep.mubr.f32.mxu0 0.0
    %v1395 = vand.u32 %v147, 4294901760
    %v1396 = vsub.f32 %v147, %v1395
    %v1397 = vand.u32 %v1396, 4294901760
    %1398 = vmatmul.mubr.f32.gmra.mrb[0].mxu0 %v1397
    %v1399 = vpop.f32.mrb[0].mxu0
    %v1400 = vadd.f32 %v1081, %v1399
    %v1401 = vpop.f32.mrb[0].mxu0
    %1402 = vmatprep.mubr.f32.mxu0 0.0
    %v1403 = vand.u32 %v150, 4294901760
    %v1404 = vsub.f32 %v150, %v1403
    %v1405 = vand.u32 %v1404, 4294901760
    %1406 = vmatmul.mubr.f32.gmra.mrb[0].mxu0 %v1405
    %v1407 = vpop.f32.mrb[0].mxu0
    %v1408 = vadd.f32 %v1088, %v1407
    %v1409 = vpop.f32.mrb[0].mxu0
    %1410 = vmatprep.mubr.f32.mxu0 0.0
    %v1411 = vand.u32 %v153, 4294901760
    %v1412 = vsub.f32 %v153, %v1411
    %v1413 = vand.u32 %v1412, 4294901760
    %1414 = vmatmul.mubr.f32.gmra.mrb[0].mxu0 %v1413
    %v1415 = vpop.f32.mrb[0].mxu0
    %v1416 = vadd.f32 %v1095, %v1415
    %v1417 = vpop.f32.mrb[0].mxu0
    %1418 = vmatprep.mubr.f32.mxu0 0.0
    %v1419 = vand.u32 %v156, 4294901760
    %v1420 = vsub.f32 %v156, %v1419
    %v1421 = vand.u32 %v1420, 4294901760
    %1422 = vmatmul.mubr.f32.gmra.mrb[0].mxu0 %v1421
    %v1423 = vpop.f32.mrb[0].mxu0
    %v1424 = vadd.f32 %v1102, %v1423
    %v1425 = vpop.f32.mrb[0].mxu0
    %1426 = vmatprep.mubr.f32.mxu0 0.0
    %v1427 = vand.u32 %v159, 4294901760
    %v1428 = vsub.f32 %v159, %v1427
    %v1429 = vand.u32 %v1428, 4294901760
    %1430 = vmatmul.mubr.f32.gmra.mrb[0].mxu0 %v1429
    %v1431 = vpop.f32.mrb[0].mxu0
    %v1432 = vadd.f32 %v1109, %v1431
    %v1433 = vpop.f32.mrb[0].mxu0
    %1434 = vdwg.mxu0
    %1435 = vmatprep.subr.mxu0 0.0
    %v1436 = vand.u32 %v62, 4294901760
    %v1437 = vsub.f32 %v62, %v1436
    %v1438 = vand.u32 %v1437, 4294901760
    %1439 = vmatpush1.msra.mxu0 %v1438
    %1440 = vmatprep.subr.mxu0 0.0
    %v1441 = vand.u32 %v163, 4294901760
    %v1442 = vsub.f32 %v163, %v1441
    %v1443 = vand.u32 %v1442, 4294901760
    %1444 = vmatpush1.msra.mxu0 %v1443
    %1445 = vmatprep.subr.mxu0 0.0
    %1446 = vmatpush1.msra.mxu0 0.0
    %1447 = vmatprep.subr.mxu0 0.0
    %1448 = vmatpush1.msra.mxu0 0.0
    %1449 = vmatprep.subr.mxu0 0.0
    %1450 = vmatpush1.msra.mxu0 0.0
    %1451 = vmatprep.subr.mxu0 0.0
    %1452 = vmatpush1.msra.mxu0 0.0
    %1453 = vmatprep.subr.mxu0 0.0
    %1454 = vmatpush1.msra.mxu0 0.0
    %1455 = vmatprep.subr.mxu0 0.0
    %1456 = vmatpush1.msra.mxu0 0.0
    %1457 = vmatprep.subr.mxu0 0.0
    %1458 = vmatpush1.msra.mxu0 0.0
    %1459 = vmatprep.subr.mxu0 0.0
    %1460 = vmatpush1.msra.mxu0 0.0
    %1461 = vmatprep.subr.mxu0 0.0
    %1462 = vmatpush1.msra.mxu0 0.0
    %1463 = vmatprep.subr.mxu0 0.0
    %1464 = vmatpush1.msra.mxu0 0.0
    %1465 = vmatprep.subr.mxu0 0.0
    %1466 = vmatpush1.msra.mxu0 0.0
    %1467 = vmatprep.subr.mxu0 0.0
    %1468 = vmatpush1.msra.mxu0 0.0
    %1469 = vmatprep.subr.mxu0 0.0
    %1470 = vmatpush1.msra.mxu0 0.0
    %1471 = vmatprep.subr.mxu0 0.0
    %1472 = vmatpush1.msra.mxu0 0.0
    %1473 = vmatprep.subr.mxu0 0.0
    %1474 = vmatpush1.msra.mxu0 0.0
    %1475 = vmatprep.subr.mxu0 0.0
    %1476 = vmatpush1.msra.mxu0 0.0
    %1477 = vmatprep.subr.mxu0 0.0
    %1478 = vmatpush1.msra.mxu0 0.0
    %1479 = vmatprep.subr.mxu0 0.0
    %1480 = vmatpush1.msra.mxu0 0.0
    %1481 = vmatprep.subr.mxu0 0.0
    %1482 = vmatpush1.msra.mxu0 0.0
    %1483 = vmatprep.subr.mxu0 0.0
    %1484 = vmatpush1.msra.mxu0 0.0
    %1485 = vmatprep.subr.mxu0 0.0
    %1486 = vmatpush1.msra.mxu0 0.0
    %1487 = vmatprep.subr.mxu0 0.0
    %1488 = vmatpush1.msra.mxu0 0.0
    %1489 = vmatprep.subr.mxu0 0.0
    %1490 = vmatpush1.msra.mxu0 0.0
    %1491 = vmatprep.subr.mxu0 0.0
    %1492 = vmatpush1.msra.mxu0 0.0
    %1493 = vmatprep.subr.mxu0 0.0
    %1494 = vmatpush1.msra.mxu0 0.0
    %1495 = vmatprep.subr.mxu0 0.0
    %1496 = vmatpush1.msra.mxu0 0.0
    %1497 = vmatprep.subr.mxu0 0.0
    %1498 = vmatpush1.msra.mxu0 0.0
    %1499 = vmatprep.subr.mxu0 0.0
    %1500 = vmatpush1.msra.mxu0 0.0
    %1501 = vmatprep.subr.mxu0 0.0
    %1502 = vmatpush1.msra.mxu0 0.0
    %1503 = vmatprep.subr.mxu0 0.0
    %1504 = vmatpush1.msra.mxu0 0.0
    %1505 = vmatprep.mubr.f32.mxu0 0.0
    %v1506 = vand.u32 %v66, 4294901760
    %1507 = vmatmul.mubr.f32.gmra.mrb[0].mxu0 %v1506
    %v1508 = vpop.f32.mrb[0].mxu0
    %v1509 = vadd.f32 %v1184, %v1508
    %v1510 = vpop.f32.mrb[0].mxu0
    %1511 = vmatprep.mubr.f32.mxu0 0.0
    %v1512 = vand.u32 %v69, 4294901760
    %1513 = vmatmul.mubr.f32.gmra.mrb[0].mxu0 %v1512
    %v1514 = vpop.f32.mrb[0].mxu0
    %v1515 = vadd.f32 %v1192, %v1514
    %v1516 = vpop.f32.mrb[0].mxu0
    %1517 = vmatprep.mubr.f32.mxu0 0.0
    %v1518 = vand.u32 %v72, 4294901760
    %1519 = vmatmul.mubr.f32.gmra.mrb[0].mxu0 %v1518
    %v1520 = vpop.f32.mrb[0].mxu0
    %v1521 = vadd.f32 %v1200, %v1520
    %v1522 = vpop.f32.mrb[0].mxu0
    %1523 = vmatprep.mubr.f32.mxu0 0.0
    %v1524 = vand.u32 %v75, 4294901760
    %1525 = vmatmul.mubr.f32.gmra.mrb[0].mxu0 %v1524
    %v1526 = vpop.f32.mrb[0].mxu0
    %v1527 = vadd.f32 %v1208, %v1526
    %v1528 = vpop.f32.mrb[0].mxu0
    %1529 = vmatprep.mubr.f32.mxu0 0.0
    %v1530 = vand.u32 %v78, 4294901760
    %1531 = vmatmul.mubr.f32.gmra.mrb[0].mxu0 %v1530
    %v1532 = vpop.f32.mrb[0].mxu0
    %v1533 = vadd.f32 %v1216, %v1532
    %v1534 = vpop.f32.mrb[0].mxu0
    %1535 = vmatprep.mubr.f32.mxu0 0.0
    %v1536 = vand.u32 %v81, 4294901760
    %1537 = vmatmul.mubr.f32.gmra.mrb[0].mxu0 %v1536
    %v1538 = vpop.f32.mrb[0].mxu0
    %v1539 = vadd.f32 %v1224, %v1538
    %v1540 = vpop.f32.mrb[0].mxu0
    %1541 = vmatprep.mubr.f32.mxu0 0.0
    %v1542 = vand.u32 %v84, 4294901760
    %1543 = vmatmul.mubr.f32.gmra.mrb[0].mxu0 %v1542
    %v1544 = vpop.f32.mrb[0].mxu0
    %v1545 = vadd.f32 %v1232, %v1544
    %v1546 = vpop.f32.mrb[0].mxu0
    %1547 = vmatprep.mubr.f32.mxu0 0.0
    %v1548 = vand.u32 %v87, 4294901760
    %1549 = vmatmul.mubr.f32.gmra.mrb[0].mxu0 %v1548
    %v1550 = vpop.f32.mrb[0].mxu0
    %v1551 = vadd.f32 %v1240, %v1550
    %v1552 = vpop.f32.mrb[0].mxu0
    %1553 = vmatprep.mubr.f32.mxu0 0.0
    %v1554 = vand.u32 %v90, 4294901760
    %1555 = vmatmul.mubr.f32.gmra.mrb[0].mxu0 %v1554
    %v1556 = vpop.f32.mrb[0].mxu0
    %v1557 = vadd.f32 %v1248, %v1556
    %v1558 = vpop.f32.mrb[0].mxu0
    %1559 = vmatprep.mubr.f32.mxu0 0.0
    %v1560 = vand.u32 %v93, 4294901760
    %1561 = vmatmul.mubr.f32.gmra.mrb[0].mxu0 %v1560
    %v1562 = vpop.f32.mrb[0].mxu0
    %v1563 = vadd.f32 %v1256, %v1562
    %v1564 = vpop.f32.mrb[0].mxu0
    %1565 = vmatprep.mubr.f32.mxu0 0.0
    %v1566 = vand.u32 %v96, 4294901760
    %1567 = vmatmul.mubr.f32.gmra.mrb[0].mxu0 %v1566
    %v1568 = vpop.f32.mrb[0].mxu0
    %v1569 = vadd.f32 %v1264, %v1568
    %v1570 = vpop.f32.mrb[0].mxu0
    %1571 = vmatprep.mubr.f32.mxu0 0.0
    %v1572 = vand.u32 %v99, 4294901760
    %1573 = vmatmul.mubr.f32.gmra.mrb[0].mxu0 %v1572
    %v1574 = vpop.f32.mrb[0].mxu0
    %v1575 = vadd.f32 %v1272, %v1574
    %v1576 = vpop.f32.mrb[0].mxu0
    %1577 = vmatprep.mubr.f32.mxu0 0.0
    %v1578 = vand.u32 %v102, 4294901760
    %1579 = vmatmul.mubr.f32.gmra.mrb[0].mxu0 %v1578
    %v1580 = vpop.f32.mrb[0].mxu0
    %v1581 = vadd.f32 %v1280, %v1580
    %v1582 = vpop.f32.mrb[0].mxu0
    %1583 = vmatprep.mubr.f32.mxu0 0.0
    %v1584 = vand.u32 %v105, 4294901760
    %1585 = vmatmul.mubr.f32.gmra.mrb[0].mxu0 %v1584
    %v1586 = vpop.f32.mrb[0].mxu0
    %v1587 = vadd.f32 %v1288, %v1586
    %v1588 = vpop.f32.mrb[0].mxu0
    %1589 = vmatprep.mubr.f32.mxu0 0.0
    %v1590 = vand.u32 %v108, 4294901760
    %1591 = vmatmul.mubr.f32.gmra.mrb[0].mxu0 %v1590
    %v1592 = vpop.f32.mrb[0].mxu0
    %v1593 = vadd.f32 %v1296, %v1592
    %v1594 = vpop.f32.mrb[0].mxu0
    %1595 = vmatprep.mubr.f32.mxu0 0.0
    %v1596 = vand.u32 %v111, 4294901760
    %1597 = vmatmul.mubr.f32.gmra.mrb[0].mxu0 %v1596
    %v1598 = vpop.f32.mrb[0].mxu0
    %v1599 = vadd.f32 %v1304, %v1598
    %v1600 = vpop.f32.mrb[0].mxu0
    %1601 = vmatprep.mubr.f32.mxu0 0.0
    %v1602 = vand.u32 %v114, 4294901760
    %1603 = vmatmul.mubr.f32.gmra.mrb[0].mxu0 %v1602
    %v1604 = vpop.f32.mrb[0].mxu0
    %v1605 = vadd.f32 %v1312, %v1604
    %v1606 = vpop.f32.mrb[0].mxu0
    %1607 = vmatprep.mubr.f32.mxu0 0.0
    %v1608 = vand.u32 %v117, 4294901760
    %1609 = vmatmul.mubr.f32.gmra.mrb[0].mxu0 %v1608
    %v1610 = vpop.f32.mrb[0].mxu0
    %v1611 = vadd.f32 %v1320, %v1610
    %v1612 = vpop.f32.mrb[0].mxu0
    %1613 = vmatprep.mubr.f32.mxu0 0.0
    %v1614 = vand.u32 %v120, 4294901760
    %1615 = vmatmul.mubr.f32.gmra.mrb[0].mxu0 %v1614
    %v1616 = vpop.f32.mrb[0].mxu0
    %v1617 = vadd.f32 %v1328, %v1616
    %v1618 = vpop.f32.mrb[0].mxu0
    %1619 = vmatprep.mubr.f32.mxu0 0.0
    %v1620 = vand.u32 %v123, 4294901760
    %1621 = vmatmul.mubr.f32.gmra.mrb[0].mxu0 %v1620
    %v1622 = vpop.f32.mrb[0].mxu0
    %v1623 = vadd.f32 %v1336, %v1622
    %v1624 = vpop.f32.mrb[0].mxu0
    %1625 = vmatprep.mubr.f32.mxu0 0.0
    %v1626 = vand.u32 %v126, 4294901760
    %1627 = vmatmul.mubr.f32.gmra.mrb[0].mxu0 %v1626
    %v1628 = vpop.f32.mrb[0].mxu0
    %v1629 = vadd.f32 %v1344, %v1628
    %v1630 = vpop.f32.mrb[0].mxu0
    %1631 = vmatprep.mubr.f32.mxu0 0.0
    %v1632 = vand.u32 %v129, 4294901760
    %1633 = vmatmul.mubr.f32.gmra.mrb[0].mxu0 %v1632
    %v1634 = vpop.f32.mrb[0].mxu0
    %v1635 = vadd.f32 %v1352, %v1634
    %v1636 = vpop.f32.mrb[0].mxu0
    %1637 = vmatprep.mubr.f32.mxu0 0.0
    %v1638 = vand.u32 %v132, 4294901760
    %1639 = vmatmul.mubr.f32.gmra.mrb[0].mxu0 %v1638
    %v1640 = vpop.f32.mrb[0].mxu0
    %v1641 = vadd.f32 %v1360, %v1640
    %v1642 = vpop.f32.mrb[0].mxu0
    %1643 = vmatprep.mubr.f32.mxu0 0.0
    %v1644 = vand.u32 %v135, 4294901760
    %1645 = vmatmul.mubr.f32.gmra.mrb[0].mxu0 %v1644
    %v1646 = vpop.f32.mrb[0].mxu0
    %v1647 = vadd.f32 %v1368, %v1646
    %v1648 = vpop.f32.mrb[0].mxu0
    %1649 = vmatprep.mubr.f32.mxu0 0.0
    %v1650 = vand.u32 %v138, 4294901760
    %1651 = vmatmul.mubr.f32.gmra.mrb[0].mxu0 %v1650
    %v1652 = vpop.f32.mrb[0].mxu0
    %v1653 = vadd.f32 %v1376, %v1652
    %v1654 = vpop.f32.mrb[0].mxu0
    %1655 = vmatprep.mubr.f32.mxu0 0.0
    %v1656 = vand.u32 %v141, 4294901760
    %1657 = vmatmul.mubr.f32.gmra.mrb[0].mxu0 %v1656
    %v1658 = vpop.f32.mrb[0].mxu0
    %v1659 = vadd.f32 %v1384, %v1658
    %v1660 = vpop.f32.mrb[0].mxu0
    %1661 = vmatprep.mubr.f32.mxu0 0.0
    %v1662 = vand.u32 %v144, 4294901760
    %1663 = vmatmul.mubr.f32.gmra.mrb[0].mxu0 %v1662
    %v1664 = vpop.f32.mrb[0].mxu0
    %v1665 = vadd.f32 %v1392, %v1664
    %v1666 = vpop.f32.mrb[0].mxu0
    %1667 = vmatprep.mubr.f32.mxu0 0.0
    %v1668 = vand.u32 %v147, 4294901760
    %1669 = vmatmul.mubr.f32.gmra.mrb[0].mxu0 %v1668
    %v1670 = vpop.f32.mrb[0].mxu0
    %v1671 = vadd.f32 %v1400, %v1670
    %v1672 = vpop.f32.mrb[0].mxu0
    %1673 = vmatprep.mubr.f32.mxu0 0.0
    %v1674 = vand.u32 %v150, 4294901760
    %1675 = vmatmul.mubr.f32.gmra.mrb[0].mxu0 %v1674
    %v1676 = vpop.f32.mrb[0].mxu0
    %v1677 = vadd.f32 %v1408, %v1676
    %v1678 = vpop.f32.mrb[0].mxu0
    %1679 = vmatprep.mubr.f32.mxu0 0.0
    %v1680 = vand.u32 %v153, 4294901760
    %1681 = vmatmul.mubr.f32.gmra.mrb[0].mxu0 %v1680
    %v1682 = vpop.f32.mrb[0].mxu0
    %v1683 = vadd.f32 %v1416, %v1682
    %v1684 = vpop.f32.mrb[0].mxu0
    %1685 = vmatprep.mubr.f32.mxu0 0.0
    %v1686 = vand.u32 %v156, 4294901760
    %1687 = vmatmul.mubr.f32.gmra.mrb[0].mxu0 %v1686
    %v1688 = vpop.f32.mrb[0].mxu0
    %v1689 = vadd.f32 %v1424, %v1688
    %v1690 = vpop.f32.mrb[0].mxu0
    %1691 = vmatprep.mubr.f32.mxu0 0.0
    %v1692 = vand.u32 %v159, 4294901760
    %1693 = vmatmul.mubr.f32.gmra.mrb[0].mxu0 %v1692
    %v1694 = vpop.f32.mrb[0].mxu0
    %v1695 = vadd.f32 %v1432, %v1694
    %v1696 = vpop.f32.mrb[0].mxu0
    %1697 = vdwg.mxu0
    %1698 = vmatprep.subr.mxu0 0.0
    %v1699 = vand.u32 %v62, 4294901760
    %1700 = vmatpush1.msra.mxu0 %v1699
    %1701 = vmatprep.subr.mxu0 0.0
    %v1702 = vand.u32 %v163, 4294901760
    %1703 = vmatpush1.msra.mxu0 %v1702
    %1704 = vmatprep.subr.mxu0 0.0
    %1705 = vmatpush1.msra.mxu0 0.0
    %1706 = vmatprep.subr.mxu0 0.0
    %1707 = vmatpush1.msra.mxu0 0.0
    %1708 = vmatprep.subr.mxu0 0.0
    %1709 = vmatpush1.msra.mxu0 0.0
    %1710 = vmatprep.subr.mxu0 0.0
    %1711 = vmatpush1.msra.mxu0 0.0
    %1712 = vmatprep.subr.mxu0 0.0
    %1713 = vmatpush1.msra.mxu0 0.0
    %1714 = vmatprep.subr.mxu0 0.0
    %1715 = vmatpush1.msra.mxu0 0.0
    %1716 = vmatprep.subr.mxu0 0.0
    %1717 = vmatpush1.msra.mxu0 0.0
    %1718 = vmatprep.subr.mxu0 0.0
    %1719 = vmatpush1.msra.mxu0 0.0
    %1720 = vmatprep.subr.mxu0 0.0
    %1721 = vmatpush1.msra.mxu0 0.0
    %1722 = vmatprep.subr.mxu0 0.0
    %1723 = vmatpush1.msra.mxu0 0.0
    %1724 = vmatprep.subr.mxu0 0.0
    %1725 = vmatpush1.msra.mxu0 0.0
    %1726 = vmatprep.subr.mxu0 0.0
    %1727 = vmatpush1.msra.mxu0 0.0
    %1728 = vmatprep.subr.mxu0 0.0
    %1729 = vmatpush1.msra.mxu0 0.0
    %1730 = vmatprep.subr.mxu0 0.0
    %1731 = vmatpush1.msra.mxu0 0.0
    %1732 = vmatprep.subr.mxu0 0.0
    %1733 = vmatpush1.msra.mxu0 0.0
    %1734 = vmatprep.subr.mxu0 0.0
    %1735 = vmatpush1.msra.mxu0 0.0
    %1736 = vmatprep.subr.mxu0 0.0
    %1737 = vmatpush1.msra.mxu0 0.0
    %1738 = vmatprep.subr.mxu0 0.0
    %1739 = vmatpush1.msra.mxu0 0.0
    %1740 = vmatprep.subr.mxu0 0.0
    %1741 = vmatpush1.msra.mxu0 0.0
    %1742 = vmatprep.subr.mxu0 0.0
    %1743 = vmatpush1.msra.mxu0 0.0
    %1744 = vmatprep.subr.mxu0 0.0
    %1745 = vmatpush1.msra.mxu0 0.0
    %1746 = vmatprep.subr.mxu0 0.0
    %1747 = vmatpush1.msra.mxu0 0.0
    %1748 = vmatprep.subr.mxu0 0.0
    %1749 = vmatpush1.msra.mxu0 0.0
    %1750 = vmatprep.subr.mxu0 0.0
    %1751 = vmatpush1.msra.mxu0 0.0
    %1752 = vmatprep.subr.mxu0 0.0
    %1753 = vmatpush1.msra.mxu0 0.0
    %1754 = vmatprep.subr.mxu0 0.0
    %1755 = vmatpush1.msra.mxu0 0.0
    %1756 = vmatprep.subr.mxu0 0.0
    %1757 = vmatpush1.msra.mxu0 0.0
    %1758 = vmatprep.subr.mxu0 0.0
    %1759 = vmatpush1.msra.mxu0 0.0
    %1760 = vmatprep.subr.mxu0 0.0
    %1761 = vmatpush1.msra.mxu0 0.0
    %1762 = vmatprep.subr.mxu0 0.0
    %1763 = vmatpush1.msra.mxu0 0.0
    %1764 = vmatprep.mubr.f32.mxu0 0.0
    %v1765 = vand.u32 %v66, 4294901760
    %1766 = vmatmul.mubr.f32.gmra.mrb[0].mxu0 %v1765
    %v1767 = vpop.f32.mrb[0].mxu0
    %v1768 = vadd.f32 %v1509, %v1767
    %v1769 = vpop.f32.mrb[0].mxu0
    %1770 = vmatprep.mubr.f32.mxu0 0.0
    %v1771 = vand.u32 %v69, 4294901760
    %1772 = vmatmul.mubr.f32.gmra.mrb[0].mxu0 %v1771
    %v1773 = vpop.f32.mrb[0].mxu0
    %v1774 = vadd.f32 %v1515, %v1773
    %v1775 = vpop.f32.mrb[0].mxu0
    %1776 = vmatprep.mubr.f32.mxu0 0.0
    %v1777 = vand.u32 %v72, 4294901760
    %1778 = vmatmul.mubr.f32.gmra.mrb[0].mxu0 %v1777
    %v1779 = vpop.f32.mrb[0].mxu0
    %v1780 = vadd.f32 %v1521, %v1779
    %v1781 = vpop.f32.mrb[0].mxu0
    %1782 = vmatprep.mubr.f32.mxu0 0.0
    %v1783 = vand.u32 %v75, 4294901760
    %1784 = vmatmul.mubr.f32.gmra.mrb[0].mxu0 %v1783
    %v1785 = vpop.f32.mrb[0].mxu0
    %v1786 = vadd.f32 %v1527, %v1785
    %v1787 = vpop.f32.mrb[0].mxu0
    %1788 = vmatprep.mubr.f32.mxu0 0.0
    %v1789 = vand.u32 %v78, 4294901760
    %1790 = vmatmul.mubr.f32.gmra.mrb[0].mxu0 %v1789
    %v1791 = vpop.f32.mrb[0].mxu0
    %v1792 = vadd.f32 %v1533, %v1791
    %v1793 = vpop.f32.mrb[0].mxu0
    %1794 = vmatprep.mubr.f32.mxu0 0.0
    %v1795 = vand.u32 %v81, 4294901760
    %1796 = vmatmul.mubr.f32.gmra.mrb[0].mxu0 %v1795
    %v1797 = vpop.f32.mrb[0].mxu0
    %v1798 = vadd.f32 %v1539, %v1797
    %v1799 = vpop.f32.mrb[0].mxu0
    %1800 = vmatprep.mubr.f32.mxu0 0.0
    %v1801 = vand.u32 %v84, 4294901760
    %1802 = vmatmul.mubr.f32.gmra.mrb[0].mxu0 %v1801
    %v1803 = vpop.f32.mrb[0].mxu0
    %v1804 = vadd.f32 %v1545, %v1803
    %v1805 = vpop.f32.mrb[0].mxu0
    %1806 = vmatprep.mubr.f32.mxu0 0.0
    %v1807 = vand.u32 %v87, 4294901760
    %1808 = vmatmul.mubr.f32.gmra.mrb[0].mxu0 %v1807
    %v1809 = vpop.f32.mrb[0].mxu0
    %v1810 = vadd.f32 %v1551, %v1809
    %v1811 = vpop.f32.mrb[0].mxu0
    %1812 = vmatprep.mubr.f32.mxu0 0.0
    %v1813 = vand.u32 %v90, 4294901760
    %1814 = vmatmul.mubr.f32.gmra.mrb[0].mxu0 %v1813
    %v1815 = vpop.f32.mrb[0].mxu0
    %v1816 = vadd.f32 %v1557, %v1815
    %v1817 = vpop.f32.mrb[0].mxu0
    %1818 = vmatprep.mubr.f32.mxu0 0.0
    %v1819 = vand.u32 %v93, 4294901760
    %1820 = vmatmul.mubr.f32.gmra.mrb[0].mxu0 %v1819
    %v1821 = vpop.f32.mrb[0].mxu0
    %v1822 = vadd.f32 %v1563, %v1821
    %v1823 = vpop.f32.mrb[0].mxu0
    %1824 = vmatprep.mubr.f32.mxu0 0.0
    %v1825 = vand.u32 %v96, 4294901760
    %1826 = vmatmul.mubr.f32.gmra.mrb[0].mxu0 %v1825
    %v1827 = vpop.f32.mrb[0].mxu0
    %v1828 = vadd.f32 %v1569, %v1827
    %v1829 = vpop.f32.mrb[0].mxu0
    %1830 = vmatprep.mubr.f32.mxu0 0.0
    %v1831 = vand.u32 %v99, 4294901760
    %1832 = vmatmul.mubr.f32.gmra.mrb[0].mxu0 %v1831
    %v1833 = vpop.f32.mrb[0].mxu0
    %v1834 = vadd.f32 %v1575, %v1833
    %v1835 = vpop.f32.mrb[0].mxu0
    %1836 = vmatprep.mubr.f32.mxu0 0.0
    %v1837 = vand.u32 %v102, 4294901760
    %1838 = vmatmul.mubr.f32.gmra.mrb[0].mxu0 %v1837
    %v1839 = vpop.f32.mrb[0].mxu0
    %v1840 = vadd.f32 %v1581, %v1839
    %v1841 = vpop.f32.mrb[0].mxu0
    %1842 = vmatprep.mubr.f32.mxu0 0.0
    %v1843 = vand.u32 %v105, 4294901760
    %1844 = vmatmul.mubr.f32.gmra.mrb[0].mxu0 %v1843
    %v1845 = vpop.f32.mrb[0].mxu0
    %v1846 = vadd.f32 %v1587, %v1845
    %v1847 = vpop.f32.mrb[0].mxu0
    %1848 = vmatprep.mubr.f32.mxu0 0.0
    %v1849 = vand.u32 %v108, 4294901760
    %1850 = vmatmul.mubr.f32.gmra.mrb[0].mxu0 %v1849
    %v1851 = vpop.f32.mrb[0].mxu0
    %v1852 = vadd.f32 %v1593, %v1851
    %v1853 = vpop.f32.mrb[0].mxu0
    %1854 = vmatprep.mubr.f32.mxu0 0.0
    %v1855 = vand.u32 %v111, 4294901760
    %1856 = vmatmul.mubr.f32.gmra.mrb[0].mxu0 %v1855
    %v1857 = vpop.f32.mrb[0].mxu0
    %v1858 = vadd.f32 %v1599, %v1857
    %v1859 = vpop.f32.mrb[0].mxu0
    %1860 = vmatprep.mubr.f32.mxu0 0.0
    %v1861 = vand.u32 %v114, 4294901760
    %1862 = vmatmul.mubr.f32.gmra.mrb[0].mxu0 %v1861
    %v1863 = vpop.f32.mrb[0].mxu0
    %v1864 = vadd.f32 %v1605, %v1863
    %v1865 = vpop.f32.mrb[0].mxu0
    %1866 = vmatprep.mubr.f32.mxu0 0.0
    %v1867 = vand.u32 %v117, 4294901760
    %1868 = vmatmul.mubr.f32.gmra.mrb[0].mxu0 %v1867
    %v1869 = vpop.f32.mrb[0].mxu0
    %v1870 = vadd.f32 %v1611, %v1869
    %v1871 = vpop.f32.mrb[0].mxu0
    %1872 = vmatprep.mubr.f32.mxu0 0.0
    %v1873 = vand.u32 %v120, 4294901760
    %1874 = vmatmul.mubr.f32.gmra.mrb[0].mxu0 %v1873
    %v1875 = vpop.f32.mrb[0].mxu0
    %v1876 = vadd.f32 %v1617, %v1875
    %v1877 = vpop.f32.mrb[0].mxu0
    %1878 = vmatprep.mubr.f32.mxu0 0.0
    %v1879 = vand.u32 %v123, 4294901760
    %1880 = vmatmul.mubr.f32.gmra.mrb[0].mxu0 %v1879
    %v1881 = vpop.f32.mrb[0].mxu0
    %v1882 = vadd.f32 %v1623, %v1881
    %v1883 = vpop.f32.mrb[0].mxu0
    %1884 = vmatprep.mubr.f32.mxu0 0.0
    %v1885 = vand.u32 %v126, 4294901760
    %1886 = vmatmul.mubr.f32.gmra.mrb[0].mxu0 %v1885
    %v1887 = vpop.f32.mrb[0].mxu0
    %v1888 = vadd.f32 %v1629, %v1887
    %v1889 = vpop.f32.mrb[0].mxu0
    %1890 = vmatprep.mubr.f32.mxu0 0.0
    %v1891 = vand.u32 %v129, 4294901760
    %1892 = vmatmul.mubr.f32.gmra.mrb[0].mxu0 %v1891
    %v1893 = vpop.f32.mrb[0].mxu0
    %v1894 = vadd.f32 %v1635, %v1893
    %v1895 = vpop.f32.mrb[0].mxu0
    %1896 = vmatprep.mubr.f32.mxu0 0.0
    %v1897 = vand.u32 %v132, 4294901760
    %1898 = vmatmul.mubr.f32.gmra.mrb[0].mxu0 %v1897
    %v1899 = vpop.f32.mrb[0].mxu0
    %v1900 = vadd.f32 %v1641, %v1899
    %v1901 = vpop.f32.mrb[0].mxu0
    %1902 = vmatprep.mubr.f32.mxu0 0.0
    %v1903 = vand.u32 %v135, 4294901760
    %1904 = vmatmul.mubr.f32.gmra.mrb[0].mxu0 %v1903
    %v1905 = vpop.f32.mrb[0].mxu0
    %v1906 = vadd.f32 %v1647, %v1905
    %v1907 = vpop.f32.mrb[0].mxu0
    %1908 = vmatprep.mubr.f32.mxu0 0.0
    %v1909 = vand.u32 %v138, 4294901760
    %1910 = vmatmul.mubr.f32.gmra.mrb[0].mxu0 %v1909
    %v1911 = vpop.f32.mrb[0].mxu0
    %v1912 = vadd.f32 %v1653, %v1911
    %v1913 = vpop.f32.mrb[0].mxu0
    %1914 = vmatprep.mubr.f32.mxu0 0.0
    %v1915 = vand.u32 %v141, 4294901760
    %1916 = vmatmul.mubr.f32.gmra.mrb[0].mxu0 %v1915
    %v1917 = vpop.f32.mrb[0].mxu0
    %v1918 = vadd.f32 %v1659, %v1917
    %v1919 = vpop.f32.mrb[0].mxu0
    %1920 = vmatprep.mubr.f32.mxu0 0.0
    %v1921 = vand.u32 %v144, 4294901760
    %1922 = vmatmul.mubr.f32.gmra.mrb[0].mxu0 %v1921
    %v1923 = vpop.f32.mrb[0].mxu0
    %v1924 = vadd.f32 %v1665, %v1923
    %v1925 = vpop.f32.mrb[0].mxu0
    %1926 = vmatprep.mubr.f32.mxu0 0.0
    %v1927 = vand.u32 %v147, 4294901760
    %1928 = vmatmul.mubr.f32.gmra.mrb[0].mxu0 %v1927
    %v1929 = vpop.f32.mrb[0].mxu0
    %v1930 = vadd.f32 %v1671, %v1929
    %v1931 = vpop.f32.mrb[0].mxu0
    %1932 = vmatprep.mubr.f32.mxu0 0.0
    %v1933 = vand.u32 %v150, 4294901760
    %1934 = vmatmul.mubr.f32.gmra.mrb[0].mxu0 %v1933
    %v1935 = vpop.f32.mrb[0].mxu0
    %v1936 = vadd.f32 %v1677, %v1935
    %v1937 = vpop.f32.mrb[0].mxu0
    %1938 = vmatprep.mubr.f32.mxu0 0.0
    %v1939 = vand.u32 %v153, 4294901760
    %1940 = vmatmul.mubr.f32.gmra.mrb[0].mxu0 %v1939
    %v1941 = vpop.f32.mrb[0].mxu0
    %v1942 = vadd.f32 %v1683, %v1941
    %v1943 = vpop.f32.mrb[0].mxu0
    %1944 = vmatprep.mubr.f32.mxu0 0.0
    %v1945 = vand.u32 %v156, 4294901760
    %1946 = vmatmul.mubr.f32.gmra.mrb[0].mxu0 %v1945
    %v1947 = vpop.f32.mrb[0].mxu0
    %v1948 = vadd.f32 %v1689, %v1947
    %v1949 = vpop.f32.mrb[0].mxu0
    %1950 = vmatprep.mubr.f32.mxu0 0.0
    %v1951 = vand.u32 %v159, 4294901760
    %1952 = vmatmul.mubr.f32.gmra.mrb[0].mxu0 %v1951
    %v1953 = vpop.f32.mrb[0].mxu0
    %v1954 = vadd.f32 %v1695, %v1953
    %v1955 = vpop.f32.mrb[0].mxu0
    %1956 = vdwg.mxu0
    %v1957 = vstv %s28
    %v1958 = vmax.f32 %v1768, %v1957
    %v1959 = vmax.f32 %v1774, %v1957
    %v1960 = vmax.f32 %v1780, %v1957
    %v1961 = vmax.f32 %v1786, %v1957
    %v1962 = vmax.f32 %v1792, %v1957
    %v1963 = vmax.f32 %v1798, %v1957
    %v1964 = vmax.f32 %v1804, %v1957
    %v1965 = vmax.f32 %v1810, %v1957
    %v1966 = vmax.f32 %v1816, %v1957
    %v1967 = vmax.f32 %v1822, %v1957
    %v1968 = vmax.f32 %v1828, %v1957
    %v1969 = vmax.f32 %v1834, %v1957
    %v1970 = vmax.f32 %v1840, %v1957
    %v1971 = vmax.f32 %v1846, %v1957
    %v1972 = vmax.f32 %v1852, %v1957
    %v1973 = vmax.f32 %v1858, %v1957
    %v1974 = vmax.f32 %v1864, %v1957
    %v1975 = vmax.f32 %v1870, %v1957
    %v1976 = vmax.f32 %v1876, %v1957
    %v1977 = vmax.f32 %v1882, %v1957
    %v1978 = vmax.f32 %v1888, %v1957
    %v1979 = vmax.f32 %v1894, %v1957
    %v1980 = vmax.f32 %v1900, %v1957
    %v1981 = vmax.f32 %v1906, %v1957
    %v1982 = vmax.f32 %v1912, %v1957
    %v1983 = vmax.f32 %v1918, %v1957
    %v1984 = vmax.f32 %v1924, %v1957
    %v1985 = vmax.f32 %v1930, %v1957
    %v1986 = vmax.f32 %v1936, %v1957
    %v1987 = vmax.f32 %v1942, %v1957
    %v1988 = vmax.f32 %v1948, %v1957
    %v1989 = vmax.f32 %v1954, %v1957
    %v1990 = vrsqrt.pop %v1958
    %v1991 = vrsqrt.pop %v1959
    %v1992 = vrsqrt.pop %v1960
    %v1993 = vrsqrt.pop %v1961
    %v1994 = vrsqrt.pop %v1962
    %v1995 = vrsqrt.pop %v1963
    %v1996 = vrsqrt.pop %v1964
    %v1997 = vrsqrt.pop %v1965
    %v1998 = vrsqrt.pop %v1966
    %v1999 = vrsqrt.pop %v1967
    %v2000 = vrsqrt.pop %v1968
    %v2001 = vrsqrt.pop %v1969
    %v2002 = vrsqrt.pop %v1970
    %v2003 = vrsqrt.pop %v1971
    %v2004 = vrsqrt.pop %v1972
    %v2005 = vrsqrt.pop %v1973
    %v2006 = vrsqrt.pop %v1974
    %v2007 = vrsqrt.pop %v1975
    %v2008 = vrsqrt.pop %v1976
    %v2009 = vrsqrt.pop %v1977
    %v2010 = vrsqrt.pop %v1978
    %v2011 = vrsqrt.pop %v1979
    %v2012 = vrsqrt.pop %v1980
    %v2013 = vrsqrt.pop %v1981
    %v2014 = vrsqrt.pop %v1982
    %v2015 = vrsqrt.pop %v1983
    %v2016 = vrsqrt.pop %v1984
    %v2017 = vrsqrt.pop %v1985
    %v2018 = vrsqrt.pop %v1986
    %v2019 = vrsqrt.pop %v1987
    %v2020 = vrsqrt.pop %v1988
    %v2021 = vrsqrt.pop %v1989
    %v2022 = vmul.f32 %v1958, %v1990
    %v2023 = vmul.f32 %v1959, %v1991
    %v2024 = vmul.f32 %v1960, %v1992
    %v2025 = vmul.f32 %v1961, %v1993
    %v2026 = vmul.f32 %v1962, %v1994
    %v2027 = vmul.f32 %v1963, %v1995
    %v2028 = vmul.f32 %v1964, %v1996
    %v2029 = vmul.f32 %v1965, %v1997
    %v2030 = vmul.f32 %v1966, %v1998
    %v2031 = vmul.f32 %v1967, %v1999
    %v2032 = vmul.f32 %v1968, %v2000
    %v2033 = vmul.f32 %v1969, %v2001
    %v2034 = vmul.f32 %v1970, %v2002
    %v2035 = vmul.f32 %v1971, %v2003
    %v2036 = vmul.f32 %v1972, %v2004
    %v2037 = vmul.f32 %v1973, %v2005
    %v2038 = vmul.f32 %v1974, %v2006
    %v2039 = vmul.f32 %v1975, %v2007
    %v2040 = vmul.f32 %v1976, %v2008
    %v2041 = vmul.f32 %v1977, %v2009
    %v2042 = vmul.f32 %v1978, %v2010
    %v2043 = vmul.f32 %v1979, %v2011
    %v2044 = vmul.f32 %v1980, %v2012
    %v2045 = vmul.f32 %v1981, %v2013
    %v2046 = vmul.f32 %v1982, %v2014
    %v2047 = vmul.f32 %v1983, %v2015
    %v2048 = vmul.f32 %v1984, %v2016
    %v2049 = vmul.f32 %v1985, %v2017
    %v2050 = vmul.f32 %v1986, %v2018
    %v2051 = vmul.f32 %v1987, %v2019
    %v2052 = vmul.f32 %v1988, %v2020
    %v2053 = vmul.f32 %v1989, %v2021
    %v2054 = vsub.f32 0.0, %v2022
    %v2055 = vsub.f32 0.0, %v2023
    %v2056 = vsub.f32 0.0, %v2024
    %v2057 = vsub.f32 0.0, %v2025
    %v2058 = vsub.f32 0.0, %v2026
    %v2059 = vsub.f32 0.0, %v2027
    %v2060 = vsub.f32 0.0, %v2028
    %v2061 = vsub.f32 0.0, %v2029
    %v2062 = vsub.f32 0.0, %v2030
    %v2063 = vsub.f32 0.0, %v2031
    %v2064 = vsub.f32 0.0, %v2032
    %v2065 = vsub.f32 0.0, %v2033
    %v2066 = vsub.f32 0.0, %v2034
    %v2067 = vsub.f32 0.0, %v2035
    %v2068 = vsub.f32 0.0, %v2036
    %v2069 = vsub.f32 0.0, %v2037
    %v2070 = vsub.f32 0.0, %v2038
    %v2071 = vsub.f32 0.0, %v2039
    %v2072 = vsub.f32 0.0, %v2040
    %v2073 = vsub.f32 0.0, %v2041
    %v2074 = vsub.f32 0.0, %v2042
    %v2075 = vsub.f32 0.0, %v2043
    %v2076 = vsub.f32 0.0, %v2044
    %v2077 = vsub.f32 0.0, %v2045
    %v2078 = vsub.f32 0.0, %v2046
    %v2079 = vsub.f32 0.0, %v2047
    %v2080 = vsub.f32 0.0, %v2048
    %v2081 = vsub.f32 0.0, %v2049
    %v2082 = vsub.f32 0.0, %v2050
    %v2083 = vsub.f32 0.0, %v2051
    %v2084 = vsub.f32 0.0, %v2052
    %v2085 = vsub.f32 0.0, %v2053
    %v2086 = vmul.f32 %v2054, 1.442695
    %v2087 = vpow.pop %v2086
    %v2088 = vmul.f32 %v2055, 1.442695
    %v2089 = vpow.pop %v2088
    %v2090 = vmul.f32 %v2056, 1.442695
    %v2091 = vpow.pop %v2090
    %v2092 = vmul.f32 %v2057, 1.442695
    %v2093 = vpow.pop %v2092
    %v2094 = vmul.f32 %v2058, 1.442695
    %v2095 = vpow.pop %v2094
    %v2096 = vmul.f32 %v2059, 1.442695
    %v2097 = vpow.pop %v2096
    %v2098 = vmul.f32 %v2060, 1.442695
    %v2099 = vpow.pop %v2098
    %v2100 = vmul.f32 %v2061, 1.442695
    %v2101 = vpow.pop %v2100
    %v2102 = vmul.f32 %v2062, 1.442695
    %v2103 = vpow.pop %v2102
    %v2104 = vmul.f32 %v2063, 1.442695
    %v2105 = vpow.pop %v2104
    %v2106 = vmul.f32 %v2064, 1.442695
    %v2107 = vpow.pop %v2106
    %v2108 = vmul.f32 %v2065, 1.442695
    %v2109 = vpow.pop %v2108
    %v2110 = vmul.f32 %v2066, 1.442695
    %v2111 = vpow.pop %v2110
    %v2112 = vmul.f32 %v2067, 1.442695
    %v2113 = vpow.pop %v2112
    %v2114 = vmul.f32 %v2068, 1.442695
    %v2115 = vpow.pop %v2114
    %v2116 = vmul.f32 %v2069, 1.442695
    %v2117 = vpow.pop %v2116
    %v2118 = vmul.f32 %v2070, 1.442695
    %v2119 = vpow.pop %v2118
    %v2120 = vmul.f32 %v2071, 1.442695
    %v2121 = vpow.pop %v2120
    %v2122 = vmul.f32 %v2072, 1.442695
    %v2123 = vpow.pop %v2122
    %v2124 = vmul.f32 %v2073, 1.442695
    %v2125 = vpow.pop %v2124
    %v2126 = vmul.f32 %v2074, 1.442695
    %v2127 = vpow.pop %v2126
    %v2128 = vmul.f32 %v2075, 1.442695
    %v2129 = vpow.pop %v2128
    %v2130 = vmul.f32 %v2076, 1.442695
    %v2131 = vpow.pop %v2130
    %v2132 = vmul.f32 %v2077, 1.442695
    %v2133 = vpow.pop %v2132
    %v2134 = vmul.f32 %v2078, 1.442695
    %v2135 = vpow.pop %v2134
    %v2136 = vmul.f32 %v2079, 1.442695
    %v2137 = vpow.pop %v2136
    %v2138 = vmul.f32 %v2080, 1.442695
    %v2139 = vpow.pop %v2138
    %v2140 = vmul.f32 %v2081, 1.442695
    %v2141 = vpow.pop %v2140
    %v2142 = vmul.f32 %v2082, 1.442695
    %v2143 = vpow.pop %v2142
    %v2144 = vmul.f32 %v2083, 1.442695
    %v2145 = vpow.pop %v2144
    %v2146 = vmul.f32 %v2084, 1.442695
    %v2147 = vpow.pop %v2146
    %v2148 = vmul.f32 %v2085, 1.442695
    %v2149 = vpow.pop %v2148
    %v2150 = vstv %s29
    %v2151 = vmul.f32 %v2087, %v2150
    %v2152 = vmul.f32 %v2089, %v2150
    %v2153 = vmul.f32 %v2091, %v2150
    %v2154 = vmul.f32 %v2093, %v2150
    %v2155 = vmul.f32 %v2095, %v2150
    %v2156 = vmul.f32 %v2097, %v2150
    %v2157 = vmul.f32 %v2099, %v2150
    %v2158 = vmul.f32 %v2101, %v2150
    %v2159 = vmul.f32 %v2103, %v2150
    %v2160 = vmul.f32 %v2105, %v2150
    %v2161 = vmul.f32 %v2107, %v2150
    %v2162 = vmul.f32 %v2109, %v2150
    %v2163 = vmul.f32 %v2111, %v2150
    %v2164 = vmul.f32 %v2113, %v2150
    %v2165 = vmul.f32 %v2115, %v2150
    %v2166 = vmul.f32 %v2117, %v2150
    %v2167 = vmul.f32 %v2119, %v2150
    %v2168 = vmul.f32 %v2121, %v2150
    %v2169 = vmul.f32 %v2123, %v2150
    %v2170 = vmul.f32 %v2125, %v2150
    %v2171 = vmul.f32 %v2127, %v2150
    %v2172 = vmul.f32 %v2129, %v2150
    %v2173 = vmul.f32 %v2131, %v2150
    %v2174 = vmul.f32 %v2133, %v2150
    %v2175 = vmul.f32 %v2135, %v2150
    %v2176 = vmul.f32 %v2137, %v2150
    %v2177 = vmul.f32 %v2139, %v2150
    %v2178 = vmul.f32 %v2141, %v2150
    %v2179 = vmul.f32 %v2143, %v2150
    %v2180 = vmul.f32 %v2145, %v2150
    %v2181 = vmul.f32 %v2147, %v2150
    %v2182 = vmul.f32 %v2149, %v2150
    %2183 = vst [vmem:[#allocation5] sm:$0xff] %v2151
    %2184 = vst [vmem:[#allocation5 + $0x8] sm:$0xff] %v2152
    %2185 = vst [vmem:[#allocation5 + $0x10] sm:$0xff] %v2153
    %2186 = vst [vmem:[#allocation5 + $0x18] sm:$0xff] %v2154
    %2187 = vst [vmem:[#allocation5 + $0x20] sm:$0xff] %v2155
    %2188 = vst [vmem:[#allocation5 + $0x28] sm:$0xff] %v2156
    %2189 = vst [vmem:[#allocation5 + $0x30] sm:$0xff] %v2157
    %2190 = vst [vmem:[#allocation5 + $0x38] sm:$0xff] %v2158
    %2191 = vst [vmem:[#allocation5 + $0x40] sm:$0xff] %v2159
    %2192 = vst [vmem:[#allocation5 + $0x48] sm:$0xff] %v2160
    %2193 = vst [vmem:[#allocation5 + $0x50] sm:$0xff] %v2161
    %2194 = vst [vmem:[#allocation5 + $0x58] sm:$0xff] %v2162
    %2195 = vst [vmem:[#allocation5 + $0x60] sm:$0xff] %v2163
    %2196 = vst [vmem:[#allocation5 + $0x68] sm:$0xff] %v2164
    %2197 = vst [vmem:[#allocation5 + $0x70] sm:$0xff] %v2165
    %2198 = vst [vmem:[#allocation5 + $0x78] sm:$0xff] %v2166
    %2199 = vst [vmem:[#allocation5 + $0x80] sm:$0xff] %v2167
    %2200 = vst [vmem:[#allocation5 + $0x88] sm:$0xff] %v2168
    %2201 = vst [vmem:[#allocation5 + $0x90] sm:$0xff] %v2169
    %2202 = vst [vmem:[#allocation5 + $0x98] sm:$0xff] %v2170
    %2203 = vst [vmem:[#allocation5 + $0xa0] sm:$0xff] %v2171
    %2204 = vst [vmem:[#allocation5 + $0xa8] sm:$0xff] %v2172
    %2205 = vst [vmem:[#allocation5 + $0xb0] sm:$0xff] %v2173
    %2206 = vst [vmem:[#allocation5 + $0xb8] sm:$0xff] %v2174
    %2207 = vst [vmem:[#allocation5 + $0xc0] sm:$0xff] %v2175
    %2208 = vst [vmem:[#allocation5 + $0xc8] sm:$0xff] %v2176
    %2209 = vst [vmem:[#allocation5 + $0xd0] sm:$0xff] %v2177
    %2210 = vst [vmem:[#allocation5 + $0xd8] sm:$0xff] %v2178
    %2211 = vst [vmem:[#allocation5 + $0xe0] sm:$0xff] %v2179
    %2212 = vst [vmem:[#allocation5 + $0xe8] sm:$0xff] %v2180
    %2213 = vst [vmem:[#allocation5 + $0xf0] sm:$0xff] %v2181
    %2214 = vst [vmem:[#allocation5 + $0xf8] sm:$0xff] %v2182
    // Predicated region
    $region18: #{matern12_forward.1} parent=1 // pred_check
      _
    $region19: #{matern12_forward.1} parent=1 // pred_check_branch
      %2216 = sbr.rel (0) target = $region21
    $region20: #{matern12_forward.1} parent=1 // pred_region
      %s2218 = ssub.s32 4096, 4096
      %2219 = vsyncadd [#allocation3], %s2218
      %s2220 = sshll.u32 [#allocation5], 4
      %s2221 = int_to_ptr.vmem [resolvable:$true] %s2220
      %2226 = dma.vmem_to_hbm [thread:$0]  %s2221, 4096, %s3, [#allocation3], 128, 128, 8
    $region21: #{matern12_forward.1} parent=1 // pred_fallthru
      _
    // Predicated region
    $region22: #{matern12_forward.1} parent=1 // pred_check
      _
    $region23: #{matern12_forward.1} parent=1 // pred_check_branch
      %2228 = sbr.rel (0) target = $region25
    $region24: #{matern12_forward.1} parent=1 // pred_region
      %2229 = dma.done [#allocation3], 4096
    $region25: #{matern12_forward.1} parent=1 // pred_fallthru
      _
    %2230 = vsyncpa [#allocation3], 1
    %2231 = vsyncpa [#allocation4], 1

</llo_original>
